<compile_context>
chip_gen: v5e
topology: v5e:2x2
jax: 0.10.0
libtpu: 0.0.40
codegen_flags: <defaults>
</compile_context>

<pallas_src>
import jax
import jax.numpy as jnp
from jax import lax
from jax.experimental import pallas as pl
from jax.experimental.pallas import tpu as pltpu


def _upsplit_kernel(x_ref, w_ref, b_ref, o_ref):
    # x_ref: (1, D+2, 4*Cin, Ns)  pre-shifted (dh,dw) taps; lanes = flattened (h,w)
    # w_ref: (3, 4*Cout, 4*Cin)   fused polyphase weight, one slab per depth tap
    # b_ref: (4*Cout, 1)          bias tiled over the 4 phases (f32)
    # o_ref: (1, Dt, 4*Cout, Ns)  output: rows = (phase, cout), lanes = (h, w)
    Dt = o_ref.shape[1]
    d0 = pl.program_id(2) * Dt

    for dt in range(Dt):                       # small static unroll (Dt <= 8)
        xs0 = x_ref[0, pl.ds(d0 + dt + 0, 1)]  # (1, 4*Cin, Ns)
        acc = jnp.dot(w_ref[0], xs0[0], preferred_element_type=jnp.float32)
        for dd in (1, 2):
            xs = x_ref[0, pl.ds(d0 + dt + dd, 1)]
            acc = acc + jnp.dot(w_ref[dd], xs[0],
                                preferred_element_type=jnp.float32)
        o_ref[0, dt] = (acc + b_ref[...]).astype(o_ref.dtype)


def _pick_spatial_tile(HW, in_rows, out_rows, itemsize, budget=6 << 20):
    # Largest multiple-of-128 divisor of HW whose (double-buffered) blocks fit
    # the VMEM budget; fall back to the full extent (always a legal block dim).
    per_col = 2 * (in_rows + out_rows) * itemsize
    best = None
    for ns in range(128, HW + 1, 128):
        if HW % ns == 0 and ns * per_col <= budget:
            best = ns
    return best if best is not None else HW


def _pick_depth_tile(D, c4o, ns, itemsize, budget=2 << 20, max_dt=8):
    best = 1
    for dt in range(1, min(D, max_dt) + 1):
        if D % dt == 0 and 2 * dt * c4o * ns * itemsize <= budget:
            best = dt
    return best


def up_split_forward(x, weight, bias, output_size):
    """ConvTranspose3d(Cin, Cout, k=(3,3,3), stride=(1,2,2), padding=1) with output_size.

    x:           (B, Cin, D, H, W)     (PyTorch NCDHW)
    weight:      (Cin, Cout, 3, 3, 3)  (PyTorch ConvTranspose3d weight layout)
    bias:        (Cout,)
    output_size: last 3 entries are the desired (D_out, H_out, W_out)
    """
    stride = (1, 2, 2)
    kernel = (3, 3, 3)
    padding = (1, 1, 1)

    B, Cin, D, H, W = x.shape
    Cout = weight.shape[1]
    in_sp = (D, H, W)
    out_sp = tuple(int(s) for s in tuple(output_size)[-3:])

    # output_padding inferred from output_size (same rule PyTorch uses).
    default = tuple((in_sp[i] - 1) * stride[i] - 2 * padding[i] + kernel[i] for i in range(3))
    out_pad = tuple(out_sp[i] - default[i] for i in range(3))
    for i in range(3):
        if not (0 <= out_pad[i] < stride[i]):
            raise ValueError("requested output_size is not reachable")
    Do, Ho, Wo = out_sp
    assert Do == D  # depth stride is 1 -> output depth == input depth

    cdtype = x.dtype
    itemsize = jnp.dtype(cdtype).itemsize
    Dp = D + 2
    HW = H * W
    C4i, C4o = 4 * Cin, 4 * Cout

    # --- halo pad (NCDHW): depth (1,1), H (0,1), W (0,1) --------------------
    x_pad = lax.pad(x.astype(cdtype), jnp.zeros((), cdtype),
                    [(0, 0, 0), (0, 0, 0), (1, 1, 0), (0, 1, 0), (0, 1, 0)])

    # --- pre-shifted (dh, dw) taps on a lane-dense flattened spatial axis ---
    # x_sh[b, dp, (dh*2+dw)*Cin + c, h*W + w] = x_pad[b, c, dp, h+dh, w+dw]
    shifts = [x_pad[:, :, :, dh:dh + H, dw:dw + W]
              for dh in range(2) for dw in range(2)]           # each (B,Cin,Dp,H,W)
    x_sh = jnp.stack(shifts, axis=1)                            # (B,4,Cin,Dp,H,W)
    x_sh = jnp.transpose(x_sh, (0, 3, 1, 2, 4, 5))              # (B,Dp,4,Cin,H,W)
    x_sh = x_sh.reshape(B, Dp, C4i, HW)

    # --- fused polyphase weight: (3, 4*Cout, 4*Cin) -------------------------
    # slab dd (kd = 2 - dd):
    #   row = (ph*2 + pw)*Cout + cout      (output H/W parity)
    #   col = (dh*2 + dw)*Cin + cin        (input shift taps)
    # For output parity p with input shift s the ConvTranspose tap is:
    #   p=0: s=0 -> k=1 (s=1 unused);  p=1: s=0 -> k=2, s=1 -> k=0
    kmap = {(0, 0): 1, (1, 0): 2, (1, 1): 0}
    w = weight.astype(cdtype)
    zero_blk = jnp.zeros((Cout, Cin), cdtype)
    slabs = []
    for dd in range(3):
        kd = 2 - dd
        rows = []
        for ph in range(2):
            for pw in range(2):
                cols = []
                for dh in range(2):
                    for dw in range(2):
                        kh = kmap.get((ph, dh))
                        kw = kmap.get((pw, dw))
                        if kh is None or kw is None:
                            cols.append(zero_blk)
                        else:
                            cols.append(jnp.transpose(w[:, :, kd, kh, kw]))  # (Cout,Cin)
                rows.append(jnp.concatenate(cols, axis=1))      # (Cout, 4*Cin)
        slabs.append(jnp.concatenate(rows, axis=0))             # (4*Cout, 4*Cin)
    w3 = jnp.stack(slabs, axis=0)                               # (3, 4*Cout, 4*Cin)
    b_all = jnp.tile(bias.astype(jnp.float32), 4).reshape(C4o, 1)

    # --- tiling --------------------------------------------------------------
    Ns = _pick_spatial_tile(HW, Dp * C4i, C4o, itemsize)
    nS = HW // Ns
    Dt = _pick_depth_tile(D, C4o, Ns, itemsize)
    nD = D // Dt
    grid = (B, nS, nD)

    out = pl.pallas_call(
        _upsplit_kernel,
        out_shape=jax.ShapeDtypeStruct((B, D, C4o, HW), cdtype),
        grid=grid,
        in_specs=[
            # full-depth tap block per (batch, spatial tile); resident across depth
            pl.BlockSpec((1, Dp, C4i, Ns), lambda b, s, db: (b, 0, 0, s)),
            pl.BlockSpec((3, C4o, C4i), lambda b, s, db: (0, 0, 0)),
            pl.BlockSpec((C4o, 1), lambda b, s, db: (0, 0)),
        ],
        out_specs=pl.BlockSpec((1, Dt, C4o, Ns), lambda b, s, db: (b, db, 0, s)),
        compiler_params=pltpu.CompilerParams(
            dimension_semantics=("parallel", "parallel", "parallel")),
    )(x_sh, w3, b_all)

    # --- wrapper-side phase interleave + back to NCDHW (layout plumbing) ----
    y = out.reshape(B, D, 2, 2, Cout, H, W)          # (b, d, ph, pw, o, h, w)
    y = jnp.transpose(y, (0, 4, 1, 5, 2, 6, 3))      # (b, o, d, h, ph, w, pw)
    y = y.reshape(B, Cout, D, 2 * H, 2 * W)[:, :, :, :Ho, :Wo]
    return y


def _reference(x, weight, bias, output_size):
    # Independent pure-JAX path: XLA dilated conv == ConvTranspose3d.
    stride = (1, 2, 2)
    kernel = (3, 3, 3)
    padding = (1, 1, 1)
    B, Cin, D, H, W = x.shape
    Cout = weight.shape[1]
    in_sp = (D, H, W)
    out_sp = tuple(int(s) for s in tuple(output_size)[-3:])
    default = tuple((in_sp[i] - 1) * stride[i] - 2 * padding[i] + kernel[i] for i in range(3))
    out_pad = tuple(out_sp[i] - default[i] for i in range(3))
    ref_pad = tuple((kernel[i] - 1 - padding[i],
                     kernel[i] - 1 - padding[i] + out_pad[i]) for i in range(3))
    w_flip = weight[:, :, ::-1, ::-1, ::-1]
    rhs = jnp.transpose(w_flip, (1, 0, 2, 3, 4))  # (O, I, kd, kh, kw)
    return lax.conv_general_dilated(
        x, rhs,
        window_strides=(1, 1, 1),
        padding=ref_pad,
        lhs_dilation=stride,
        dimension_numbers=("NCDHW", "OIDHW", "NCDHW"),
    ) + bias.reshape(1, Cout, 1, 1, 1)


if __name__ == "__main__":
    key = jax.random.PRNGKey(0)
    kx, kw_, kb = jax.random.split(key, 3)

    # small shapes consistent with the module: x is 5D (N, C, D, H, W)
    B, Cin, Cout, D, H, W = 2, 4, 8, 4, 16, 16
    x = jax.random.normal(kx, (B, Cin, D, H, W), jnp.float32)
    weight = 0.1 * jax.random.normal(kw_, (Cin, Cout, 3, 3, 3), jnp.float32)
    bias = 0.1 * jax.random.normal(kb, (Cout,), jnp.float32)

    fwd = jax.jit(up_split_forward, static_argnums=(3,))

    # Exercise both output_size conventions (output_padding = 1 and 0 in H/W).
    for output_size in ((D, 2 * H, 2 * W), (D, 2 * H - 1, 2 * W - 1)):
        out = jax.block_until_ready(fwd(x, weight, bias, output_size))
        assert out.shape == (B, Cout) + tuple(output_size), out.shape
        ref = _reference(x, weight, bias, output_size)
        err = float(jnp.max(jnp.abs(out - ref)))
        assert jnp.allclose(out, ref, atol=1e-4, rtol=1e-4), err

    print("KERNEL_OK")
</pallas_src>

<mosaic_0001>
module attributes {stable_mosaic.version = 11 : i64} {
  func.func @_upsplit_kernel(%arg0: i32, %arg1: i32, %arg2: i32, %arg3: memref<1x6x16x256xf32, #tpu.memory_space<vmem>>, %arg4: memref<3x32x16xf32, #tpu.memory_space<vmem>>, %arg5: memref<32x1xf32, #tpu.memory_space<vmem>>, %arg6: memref<1x4x32x256xf32, #tpu.memory_space<vmem>>) attributes {dimension_semantics = [#tpu.dimension_semantics<parallel>, #tpu.dimension_semantics<parallel>, #tpu.dimension_semantics<parallel>], iteration_bounds = array<i64: 2, 1, 1>, scalar_prefetch = 0 : i64, scratch_operands = 0 : i64, tpu.core_type = #tpu.core_type<tc>, window_params = [{transform_indices = @transform_0, window_bounds = array<i64: 1, 6, 16, 256>}, {pipeline_mode = #tpu.pipeline_mode<synchronous>, transform_indices = @transform_1, window_bounds = array<i64: 3, 32, 16>}, {pipeline_mode = #tpu.pipeline_mode<synchronous>, transform_indices = @transform_2, window_bounds = array<i64: 32, 1>}, {transform_indices = @transform_3, window_bounds = array<i64: 1, 4, 32, 256>}]} {
    %c4_i32 = arith.constant 4 : i32
    %0 = arith.muli %arg2, %c4_i32 : i32
    %c0_i32 = arith.constant 0 : i32
    %1 = arith.addi %0, %c0_i32 : i32
    %c0_i32_0 = arith.constant 0 : i32
    %2 = arith.addi %1, %c0_i32_0 : i32
    %c0 = arith.constant 0 : index
    %3 = arith.index_cast %2 : i32 to index
    %c0_1 = arith.constant 0 : index
    %c0_2 = arith.constant 0 : index
    %4 = vector.load %arg3[%c0, %3, %c0_1, %c0_2] : memref<1x6x16x256xf32, #tpu.memory_space<vmem>>, vector<1x1x16x256xf32>
    %5 = vector.shape_cast %4 : vector<1x1x16x256xf32> to vector<1x16x256xf32>
    %c0_3 = arith.constant 0 : index
    %c0_4 = arith.constant 0 : index
    %c0_5 = arith.constant 0 : index
    %6 = vector.load %arg4[%c0_3, %c0_4, %c0_5] : memref<3x32x16xf32, #tpu.memory_space<vmem>>, vector<1x32x16xf32>
    %7 = vector.shape_cast %6 : vector<1x32x16xf32> to vector<32x16xf32>
    %8 = vector.shape_cast %5 : vector<1x16x256xf32> to vector<16x256xf32>
    %cst = arith.constant dense<0.000000e+00> : vector<32x256xf32>
    %9 = tpu.matmul %7, %8, %cst {dimension_numbers = #tpu.dot_dimension_numbers<[1], [0], [0], [1], [0, 0, 1, 1], [], []>} : vector<32x16xf32>, vector<16x256xf32>, vector<32x256xf32> -> vector<32x256xf32>
    %c0_i32_6 = arith.constant 0 : i32
    %10 = arith.addi %0, %c0_i32_6 : i32
    %c1_i32 = arith.constant 1 : i32
    %11 = arith.addi %10, %c1_i32 : i32
    %c0_7 = arith.constant 0 : index
    %12 = arith.index_cast %11 : i32 to index
    %c0_8 = arith.constant 0 : index
    %c0_9 = arith.constant 0 : index
    %13 = vector.load %arg3[%c0_7, %12, %c0_8, %c0_9] : memref<1x6x16x256xf32, #tpu.memory_space<vmem>>, vector<1x1x16x256xf32>
    %14 = vector.shape_cast %13 : vector<1x1x16x256xf32> to vector<1x16x256xf32>
    %c1 = arith.constant 1 : index
    %c0_10 = arith.constant 0 : index
    %c0_11 = arith.constant 0 : index
    %15 = vector.load %arg4[%c1, %c0_10, %c0_11] : memref<3x32x16xf32, #tpu.memory_space<vmem>>, vector<1x32x16xf32>
    %16 = vector.shape_cast %15 : vector<1x32x16xf32> to vector<32x16xf32>
    %17 = vector.shape_cast %14 : vector<1x16x256xf32> to vector<16x256xf32>
    %cst_12 = arith.constant dense<0.000000e+00> : vector<32x256xf32>
    %18 = tpu.matmul %16, %17, %cst_12 {dimension_numbers = #tpu.dot_dimension_numbers<[1], [0], [0], [1], [0, 0, 1, 1], [], []>} : vector<32x16xf32>, vector<16x256xf32>, vector<32x256xf32> -> vector<32x256xf32>
    %19 = arith.addf %9, %18 : vector<32x256xf32>
    %c0_i32_13 = arith.constant 0 : i32
    %20 = arith.addi %0, %c0_i32_13 : i32
    %c2_i32 = arith.constant 2 : i32
    %21 = arith.addi %20, %c2_i32 : i32
    %c0_14 = arith.constant 0 : index
    %22 = arith.index_cast %21 : i32 to index
    %c0_15 = arith.constant 0 : index
    %c0_16 = arith.constant 0 : index
    %23 = vector.load %arg3[%c0_14, %22, %c0_15, %c0_16] : memref<1x6x16x256xf32, #tpu.memory_space<vmem>>, vector<1x1x16x256xf32>
    %24 = vector.shape_cast %23 : vector<1x1x16x256xf32> to vector<1x16x256xf32>
    %c2 = arith.constant 2 : index
    %c0_17 = arith.constant 0 : index
    %c0_18 = arith.constant 0 : index
    %25 = vector.load %arg4[%c2, %c0_17, %c0_18] : memref<3x32x16xf32, #tpu.memory_space<vmem>>, vector<1x32x16xf32>
    %26 = vector.shape_cast %25 : vector<1x32x16xf32> to vector<32x16xf32>
    %27 = vector.shape_cast %24 : vector<1x16x256xf32> to vector<16x256xf32>
    %cst_19 = arith.constant dense<0.000000e+00> : vector<32x256xf32>
    %28 = tpu.matmul %26, %27, %cst_19 {dimension_numbers = #tpu.dot_dimension_numbers<[1], [0], [0], [1], [0, 0, 1, 1], [], []>} : vector<32x16xf32>, vector<16x256xf32>, vector<32x256xf32> -> vector<32x256xf32>
    %29 = arith.addf %19, %28 : vector<32x256xf32>
    %c0_20 = arith.constant 0 : index
    %c0_21 = arith.constant 0 : index
    %30 = vector.load %arg5[%c0_20, %c0_21] : memref<32x1xf32, #tpu.memory_space<vmem>>, vector<32x1xf32>
    %31 = vector.broadcast %30 : vector<32x1xf32> to vector<32x256xf32>
    %32 = arith.addf %29, %31 : vector<32x256xf32>
    %c0_22 = arith.constant 0 : index
    %c0_23 = arith.constant 0 : index
    %c0_24 = arith.constant 0 : index
    %c0_25 = arith.constant 0 : index
    %33 = vector.load %arg6[%c0_22, %c0_23, %c0_24, %c0_25] : memref<1x4x32x256xf32, #tpu.memory_space<vmem>>, vector<1x1x32x256xf32>
    %34 = vector.shape_cast %33 : vector<1x1x32x256xf32> to vector<32x256xf32>
    %35 = vector.shape_cast %32 : vector<32x256xf32> to vector<1x1x32x256xf32>
    tpu.vector_store %arg6[%c0_22, %c0_23, %c0_24, %c0_25], %35 {strides = array<i32>} : memref<1x4x32x256xf32, #tpu.memory_space<vmem>>, vector<1x1x32x256xf32>,
    %c1_i32_26 = arith.constant 1 : i32
    %36 = arith.addi %0, %c1_i32_26 : i32
    %c0_i32_27 = arith.constant 0 : i32
    %37 = arith.addi %36, %c0_i32_27 : i32
    %c0_28 = arith.constant 0 : index
    %38 = arith.index_cast %37 : i32 to index
    %c0_29 = arith.constant 0 : index
    %c0_30 = arith.constant 0 : index
    %39 = vector.load %arg3[%c0_28, %38, %c0_29, %c0_30] : memref<1x6x16x256xf32, #tpu.memory_space<vmem>>, vector<1x1x16x256xf32>
    %40 = vector.shape_cast %39 : vector<1x1x16x256xf32> to vector<1x16x256xf32>
    %c0_31 = arith.constant 0 : index
    %c0_32 = arith.constant 0 : index
    %c0_33 = arith.constant 0 : index
    %41 = vector.load %arg4[%c0_31, %c0_32, %c0_33] : memref<3x32x16xf32, #tpu.memory_space<vmem>>, vector<1x32x16xf32>
    %42 = vector.shape_cast %41 : vector<1x32x16xf32> to vector<32x16xf32>
    %43 = vector.shape_cast %40 : vector<1x16x256xf32> to vector<16x256xf32>
    %cst_34 = arith.constant dense<0.000000e+00> : vector<32x256xf32>
    %44 = tpu.matmul %42, %43, %cst_34 {dimension_numbers = #tpu.dot_dimension_numbers<[1], [0], [0], [1], [0, 0, 1, 1], [], []>} : vector<32x16xf32>, vector<16x256xf32>, vector<32x256xf32> -> vector<32x256xf32>
    %c1_i32_35 = arith.constant 1 : i32
    %45 = arith.addi %0, %c1_i32_35 : i32
    %c1_i32_36 = arith.constant 1 : i32
    %46 = arith.addi %45, %c1_i32_36 : i32
    %c0_37 = arith.constant 0 : index
    %47 = arith.index_cast %46 : i32 to index
    %c0_38 = arith.constant 0 : index
    %c0_39 = arith.constant 0 : index
    %48 = vector.load %arg3[%c0_37, %47, %c0_38, %c0_39] : memref<1x6x16x256xf32, #tpu.memory_space<vmem>>, vector<1x1x16x256xf32>
    %49 = vector.shape_cast %48 : vector<1x1x16x256xf32> to vector<1x16x256xf32>
    %c1_40 = arith.constant 1 : index
    %c0_41 = arith.constant 0 : index
    %c0_42 = arith.constant 0 : index
    %50 = vector.load %arg4[%c1_40, %c0_41, %c0_42] : memref<3x32x16xf32, #tpu.memory_space<vmem>>, vector<1x32x16xf32>
    %51 = vector.shape_cast %50 : vector<1x32x16xf32> to vector<32x16xf32>
    %52 = vector.shape_cast %49 : vector<1x16x256xf32> to vector<16x256xf32>
    %cst_43 = arith.constant dense<0.000000e+00> : vector<32x256xf32>
    %53 = tpu.matmul %51, %52, %cst_43 {dimension_numbers = #tpu.dot_dimension_numbers<[1], [0], [0], [1], [0, 0, 1, 1], [], []>} : vector<32x16xf32>, vector<16x256xf32>, vector<32x256xf32> -> vector<32x256xf32>
    %54 = arith.addf %44, %53 : vector<32x256xf32>
    %c1_i32_44 = arith.constant 1 : i32
    %55 = arith.addi %0, %c1_i32_44 : i32
    %c2_i32_45 = arith.constant 2 : i32
    %56 = arith.addi %55, %c2_i32_45 : i32
    %c0_46 = arith.constant 0 : index
    %57 = arith.index_cast %56 : i32 to index
    %c0_47 = arith.constant 0 : index
    %c0_48 = arith.constant 0 : index
    %58 = vector.load %arg3[%c0_46, %57, %c0_47, %c0_48] : memref<1x6x16x256xf32, #tpu.memory_space<vmem>>, vector<1x1x16x256xf32>
    %59 = vector.shape_cast %58 : vector<1x1x16x256xf32> to vector<1x16x256xf32>
    %c2_49 = arith.constant 2 : index
    %c0_50 = arith.constant 0 : index
    %c0_51 = arith.constant 0 : index
    %60 = vector.load %arg4[%c2_49, %c0_50, %c0_51] : memref<3x32x16xf32, #tpu.memory_space<vmem>>, vector<1x32x16xf32>
    %61 = vector.shape_cast %60 : vector<1x32x16xf32> to vector<32x16xf32>
    %62 = vector.shape_cast %59 : vector<1x16x256xf32> to vector<16x256xf32>
    %cst_52 = arith.constant dense<0.000000e+00> : vector<32x256xf32>
    %63 = tpu.matmul %61, %62, %cst_52 {dimension_numbers = #tpu.dot_dimension_numbers<[1], [0], [0], [1], [0, 0, 1, 1], [], []>} : vector<32x16xf32>, vector<16x256xf32>, vector<32x256xf32> -> vector<32x256xf32>
    %64 = arith.addf %54, %63 : vector<32x256xf32>
    %c0_53 = arith.constant 0 : index
    %c0_54 = arith.constant 0 : index
    %65 = vector.load %arg5[%c0_53, %c0_54] : memref<32x1xf32, #tpu.memory_space<vmem>>, vector<32x1xf32>
    %66 = vector.broadcast %65 : vector<32x1xf32> to vector<32x256xf32>
    %67 = arith.addf %64, %66 : vector<32x256xf32>
    %c0_55 = arith.constant 0 : index
    %c1_56 = arith.constant 1 : index
    %c0_57 = arith.constant 0 : index
    %c0_58 = arith.constant 0 : index
    %68 = vector.load %arg6[%c0_55, %c1_56, %c0_57, %c0_58] : memref<1x4x32x256xf32, #tpu.memory_space<vmem>>, vector<1x1x32x256xf32>
    %69 = vector.shape_cast %68 : vector<1x1x32x256xf32> to vector<32x256xf32>
    %70 = vector.shape_cast %67 : vector<32x256xf32> to vector<1x1x32x256xf32>
    tpu.vector_store %arg6[%c0_55, %c1_56, %c0_57, %c0_58], %70 {strides = array<i32>} : memref<1x4x32x256xf32, #tpu.memory_space<vmem>>, vector<1x1x32x256xf32>,
    %c2_i32_59 = arith.constant 2 : i32
    %71 = arith.addi %0, %c2_i32_59 : i32
    %c0_i32_60 = arith.constant 0 : i32
    %72 = arith.addi %71, %c0_i32_60 : i32
    %c0_61 = arith.constant 0 : index
    %73 = arith.index_cast %72 : i32 to index
    %c0_62 = arith.constant 0 : index
    %c0_63 = arith.constant 0 : index
    %74 = vector.load %arg3[%c0_61, %73, %c0_62, %c0_63] : memref<1x6x16x256xf32, #tpu.memory_space<vmem>>, vector<1x1x16x256xf32>
    %75 = vector.shape_cast %74 : vector<1x1x16x256xf32> to vector<1x16x256xf32>
    %c0_64 = arith.constant 0 : index
    %c0_65 = arith.constant 0 : index
    %c0_66 = arith.constant 0 : index
    %76 = vector.load %arg4[%c0_64, %c0_65, %c0_66] : memref<3x32x16xf32, #tpu.memory_space<vmem>>, vector<1x32x16xf32>
    %77 = vector.shape_cast %76 : vector<1x32x16xf32> to vector<32x16xf32>
    %78 = vector.shape_cast %75 : vector<1x16x256xf32> to vector<16x256xf32>
    %cst_67 = arith.constant dense<0.000000e+00> : vector<32x256xf32>
    %79 = tpu.matmul %77, %78, %cst_67 {dimension_numbers = #tpu.dot_dimension_numbers<[1], [0], [0], [1], [0, 0, 1, 1], [], []>} : vector<32x16xf32>, vector<16x256xf32>, vector<32x256xf32> -> vector<32x256xf32>
    %c2_i32_68 = arith.constant 2 : i32
    %80 = arith.addi %0, %c2_i32_68 : i32
    %c1_i32_69 = arith.constant 1 : i32
    %81 = arith.addi %80, %c1_i32_69 : i32
    %c0_70 = arith.constant 0 : index
    %82 = arith.index_cast %81 : i32 to index
    %c0_71 = arith.constant 0 : index
    %c0_72 = arith.constant 0 : index
    %83 = vector.load %arg3[%c0_70, %82, %c0_71, %c0_72] : memref<1x6x16x256xf32, #tpu.memory_space<vmem>>, vector<1x1x16x256xf32>
    %84 = vector.shape_cast %83 : vector<1x1x16x256xf32> to vector<1x16x256xf32>
    %c1_73 = arith.constant 1 : index
    %c0_74 = arith.constant 0 : index
    %c0_75 = arith.constant 0 : index
    %85 = vector.load %arg4[%c1_73, %c0_74, %c0_75] : memref<3x32x16xf32, #tpu.memory_space<vmem>>, vector<1x32x16xf32>
    %86 = vector.shape_cast %85 : vector<1x32x16xf32> to vector<32x16xf32>
    %87 = vector.shape_cast %84 : vector<1x16x256xf32> to vector<16x256xf32>
    %cst_76 = arith.constant dense<0.000000e+00> : vector<32x256xf32>
    %88 = tpu.matmul %86, %87, %cst_76 {dimension_numbers = #tpu.dot_dimension_numbers<[1], [0], [0], [1], [0, 0, 1, 1], [], []>} : vector<32x16xf32>, vector<16x256xf32>, vector<32x256xf32> -> vector<32x256xf32>
    %89 = arith.addf %79, %88 : vector<32x256xf32>
    %c2_i32_77 = arith.constant 2 : i32
    %90 = arith.addi %0, %c2_i32_77 : i32
    %c2_i32_78 = arith.constant 2 : i32
    %91 = arith.addi %90, %c2_i32_78 : i32
    %c0_79 = arith.constant 0 : index
    %92 = arith.index_cast %91 : i32 to index
    %c0_80 = arith.constant 0 : index
    %c0_81 = arith.constant 0 : index
    %93 = vector.load %arg3[%c0_79, %92, %c0_80, %c0_81] : memref<1x6x16x256xf32, #tpu.memory_space<vmem>>, vector<1x1x16x256xf32>
    %94 = vector.shape_cast %93 : vector<1x1x16x256xf32> to vector<1x16x256xf32>
    %c2_82 = arith.constant 2 : index
    %c0_83 = arith.constant 0 : index
    %c0_84 = arith.constant 0 : index
    %95 = vector.load %arg4[%c2_82, %c0_83, %c0_84] : memref<3x32x16xf32, #tpu.memory_space<vmem>>, vector<1x32x16xf32>
    %96 = vector.shape_cast %95 : vector<1x32x16xf32> to vector<32x16xf32>
    %97 = vector.shape_cast %94 : vector<1x16x256xf32> to vector<16x256xf32>
    %cst_85 = arith.constant dense<0.000000e+00> : vector<32x256xf32>
    %98 = tpu.matmul %96, %97, %cst_85 {dimension_numbers = #tpu.dot_dimension_numbers<[1], [0], [0], [1], [0, 0, 1, 1], [], []>} : vector<32x16xf32>, vector<16x256xf32>, vector<32x256xf32> -> vector<32x256xf32>
    %99 = arith.addf %89, %98 : vector<32x256xf32>
    %c0_86 = arith.constant 0 : index
    %c0_87 = arith.constant 0 : index
    %100 = vector.load %arg5[%c0_86, %c0_87] : memref<32x1xf32, #tpu.memory_space<vmem>>, vector<32x1xf32>
    %101 = vector.broadcast %100 : vector<32x1xf32> to vector<32x256xf32>
    %102 = arith.addf %99, %101 : vector<32x256xf32>
    %c0_88 = arith.constant 0 : index
    %c2_89 = arith.constant 2 : index
    %c0_90 = arith.constant 0 : index
    %c0_91 = arith.constant 0 : index
    %103 = vector.load %arg6[%c0_88, %c2_89, %c0_90, %c0_91] : memref<1x4x32x256xf32, #tpu.memory_space<vmem>>, vector<1x1x32x256xf32>
    %104 = vector.shape_cast %103 : vector<1x1x32x256xf32> to vector<32x256xf32>
    %105 = vector.shape_cast %102 : vector<32x256xf32> to vector<1x1x32x256xf32>
    tpu.vector_store %arg6[%c0_88, %c2_89, %c0_90, %c0_91], %105 {strides = array<i32>} : memref<1x4x32x256xf32, #tpu.memory_space<vmem>>, vector<1x1x32x256xf32>,
    %c3_i32 = arith.constant 3 : i32
    %106 = arith.addi %0, %c3_i32 : i32
    %c0_i32_92 = arith.constant 0 : i32
    %107 = arith.addi %106, %c0_i32_92 : i32
    %c0_93 = arith.constant 0 : index
    %108 = arith.index_cast %107 : i32 to index
    %c0_94 = arith.constant 0 : index
    %c0_95 = arith.constant 0 : index
    %109 = vector.load %arg3[%c0_93, %108, %c0_94, %c0_95] : memref<1x6x16x256xf32, #tpu.memory_space<vmem>>, vector<1x1x16x256xf32>
    %110 = vector.shape_cast %109 : vector<1x1x16x256xf32> to vector<1x16x256xf32>
    %c0_96 = arith.constant 0 : index
    %c0_97 = arith.constant 0 : index
    %c0_98 = arith.constant 0 : index
    %111 = vector.load %arg4[%c0_96, %c0_97, %c0_98] : memref<3x32x16xf32, #tpu.memory_space<vmem>>, vector<1x32x16xf32>
    %112 = vector.shape_cast %111 : vector<1x32x16xf32> to vector<32x16xf32>
    %113 = vector.shape_cast %110 : vector<1x16x256xf32> to vector<16x256xf32>
    %cst_99 = arith.constant dense<0.000000e+00> : vector<32x256xf32>
    %114 = tpu.matmul %112, %113, %cst_99 {dimension_numbers = #tpu.dot_dimension_numbers<[1], [0], [0], [1], [0, 0, 1, 1], [], []>} : vector<32x16xf32>, vector<16x256xf32>, vector<32x256xf32> -> vector<32x256xf32>
    %c3_i32_100 = arith.constant 3 : i32
    %115 = arith.addi %0, %c3_i32_100 : i32
    %c1_i32_101 = arith.constant 1 : i32
    %116 = arith.addi %115, %c1_i32_101 : i32
    %c0_102 = arith.constant 0 : index
    %117 = arith.index_cast %116 : i32 to index
    %c0_103 = arith.constant 0 : index
    %c0_104 = arith.constant 0 : index
    %118 = vector.load %arg3[%c0_102, %117, %c0_103, %c0_104] : memref<1x6x16x256xf32, #tpu.memory_space<vmem>>, vector<1x1x16x256xf32>
    %119 = vector.shape_cast %118 : vector<1x1x16x256xf32> to vector<1x16x256xf32>
    %c1_105 = arith.constant 1 : index
    %c0_106 = arith.constant 0 : index
    %c0_107 = arith.constant 0 : index
    %120 = vector.load %arg4[%c1_105, %c0_106, %c0_107] : memref<3x32x16xf32, #tpu.memory_space<vmem>>, vector<1x32x16xf32>
    %121 = vector.shape_cast %120 : vector<1x32x16xf32> to vector<32x16xf32>
    %122 = vector.shape_cast %119 : vector<1x16x256xf32> to vector<16x256xf32>
    %cst_108 = arith.constant dense<0.000000e+00> : vector<32x256xf32>
    %123 = tpu.matmul %121, %122, %cst_108 {dimension_numbers = #tpu.dot_dimension_numbers<[1], [0], [0], [1], [0, 0, 1, 1], [], []>} : vector<32x16xf32>, vector<16x256xf32>, vector<32x256xf32> -> vector<32x256xf32>
    %124 = arith.addf %114, %123 : vector<32x256xf32>
    %c3_i32_109 = arith.constant 3 : i32
    %125 = arith.addi %0, %c3_i32_109 : i32
    %c2_i32_110 = arith.constant 2 : i32
    %126 = arith.addi %125, %c2_i32_110 : i32
    %c0_111 = arith.constant 0 : index
    %127 = arith.index_cast %126 : i32 to index
    %c0_112 = arith.constant 0 : index
    %c0_113 = arith.constant 0 : index
    %128 = vector.load %arg3[%c0_111, %127, %c0_112, %c0_113] : memref<1x6x16x256xf32, #tpu.memory_space<vmem>>, vector<1x1x16x256xf32>
    %129 = vector.shape_cast %128 : vector<1x1x16x256xf32> to vector<1x16x256xf32>
    %c2_114 = arith.constant 2 : index
    %c0_115 = arith.constant 0 : index
    %c0_116 = arith.constant 0 : index
    %130 = vector.load %arg4[%c2_114, %c0_115, %c0_116] : memref<3x32x16xf32, #tpu.memory_space<vmem>>, vector<1x32x16xf32>
    %131 = vector.shape_cast %130 : vector<1x32x16xf32> to vector<32x16xf32>
    %132 = vector.shape_cast %129 : vector<1x16x256xf32> to vector<16x256xf32>
    %cst_117 = arith.constant dense<0.000000e+00> : vector<32x256xf32>
    %133 = tpu.matmul %131, %132, %cst_117 {dimension_numbers = #tpu.dot_dimension_numbers<[1], [0], [0], [1], [0, 0, 1, 1], [], []>} : vector<32x16xf32>, vector<16x256xf32>, vector<32x256xf32> -> vector<32x256xf32>
    %134 = arith.addf %124, %133 : vector<32x256xf32>
    %c0_118 = arith.constant 0 : index
    %c0_119 = arith.constant 0 : index
    %135 = vector.load %arg5[%c0_118, %c0_119] : memref<32x1xf32, #tpu.memory_space<vmem>>, vector<32x1xf32>
    %136 = vector.broadcast %135 : vector<32x1xf32> to vector<32x256xf32>
    %137 = arith.addf %134, %136 : vector<32x256xf32>
    %c0_120 = arith.constant 0 : index
    %c3 = arith.constant 3 : index
    %c0_121 = arith.constant 0 : index
    %c0_122 = arith.constant 0 : index
    %138 = vector.load %arg6[%c0_120, %c3, %c0_121, %c0_122] : memref<1x4x32x256xf32, #tpu.memory_space<vmem>>, vector<1x1x32x256xf32>
    %139 = vector.shape_cast %138 : vector<1x1x32x256xf32> to vector<32x256xf32>
    %140 = vector.shape_cast %137 : vector<32x256xf32> to vector<1x1x32x256xf32>
    tpu.vector_store %arg6[%c0_120, %c3, %c0_121, %c0_122], %140 {strides = array<i32>} : memref<1x4x32x256xf32, #tpu.memory_space<vmem>>, vector<1x1x32x256xf32>,
    return
  }
  func.func @transform_0(%arg0: i32, %arg1: i32, %arg2: i32) -> (i32, i32, i32, i32) {
    %c0_i32 = arith.constant 0 : i32
    %c0_i32_0 = arith.constant 0 : i32
    %c0_i32_1 = arith.constant 0 : i32
    return %arg0, %c0_i32, %c0_i32_0, %arg1 : i32, i32, i32, i32
  }
  func.func @transform_1(%arg0: i32, %arg1: i32, %arg2: i32) -> (i32, i32, i32) {
    %c0_i32 = arith.constant 0 : i32
    %c0_i32_0 = arith.constant 0 : i32
    %c0_i32_1 = arith.constant 0 : i32
    %c0_i32_2 = arith.constant 0 : i32
    return %c0_i32, %c0_i32_0, %c0_i32_1 : i32, i32, i32
  }
  func.func @transform_2(%arg0: i32, %arg1: i32, %arg2: i32) -> (i32, i32) {
    %c0_i32 = arith.constant 0 : i32
    %c0_i32_0 = arith.constant 0 : i32
    %c0_i32_1 = arith.constant 0 : i32
    return %c0_i32, %c0_i32_0 : i32, i32
  }
  func.func @transform_3(%arg0: i32, %arg1: i32, %arg2: i32) -> (i32, i32, i32, i32) {
    %c0_i32 = arith.constant 0 : i32
    %c0_i32_0 = arith.constant 0 : i32
    return %arg0, %arg2, %c0_i32, %arg1 : i32, i32, i32, i32
  }
}

</mosaic_0001>

<llo_original>
// kernel: tile.0
$region0: #{tile.0}
  %s0 = inlined_call_operand.vmem [shape: f32[4,8], index: 0, kind: input, shape index: {}]
  %s1 = inlined_call_operand.vmem [shape: f32[32,1], index: 1, kind: output, shape index: {}]
  $region1: #{tile.0} parent=0
    #allocation0 [shape = 'u8[4096]{0}', space=vmem, size = 0x1000, scoped, tag = 'scoped mem for input reshape']
    %s3 = ssub.s32 16, 1
    %v4 = vld [vmem:[%s0] sm:%s3]
    %5 = vst [vmem:[#allocation0] sm:%s3] %v4
    %v6 = vld [vmem:[#allocation0] sm:$0xf]
    %vm7 = vcmask 7168
    %8 = vst.msk [vmem:[%s1] ss:$8 sm:$0xf] %vm7, %v6
    %v9 = vld [vmem:[#allocation0] sm:$0xf]
    %10 = vrot.lane.b32.xlu0 %v9, 127
    %v11 = vpop.permute.xlu0 %10
    %vm12 = vcmask 7168
    %s13 = scalar_lea.vmem %s1, 1
    %14 = vst.msk [vmem:[%s13] ss:$8 sm:$0xf] %vm12, %v11
    %v15 = vld [vmem:[#allocation0] sm:$0xf]
    %16 = vrot.lane.b32.xlu0 %v15, 126
    %v17 = vpop.permute.xlu0 %16
    %vm18 = vcmask 7168
    %s19 = scalar_lea.vmem %s1, 2
    %20 = vst.msk [vmem:[%s19] ss:$8 sm:$0xf] %vm18, %v17
    %v21 = vld [vmem:[#allocation0] sm:$0xf]
    %22 = vrot.lane.b32.xlu0 %v21, 125
    %v23 = vpop.permute.xlu0 %22
    %vm24 = vcmask 7168
    %s25 = scalar_lea.vmem %s1, 3
    %26 = vst.msk [vmem:[%s25] ss:$8 sm:$0xf] %vm24, %v23
    %v27 = vld [vmem:[#allocation0] sm:$0xf]
    %28 = vrot.lane.b32.xlu0 %v27, 124
    %v29 = vpop.permute.xlu0 %28
    %vm30 = vcmask 7168
    %s31 = scalar_lea.vmem %s1, 4
    %32 = vst.msk [vmem:[%s31] ss:$8 sm:$0xf] %vm30, %v29
    %v33 = vld [vmem:[#allocation0] sm:$0xf]
    %34 = vrot.lane.b32.xlu0 %v33, 123
    %v35 = vpop.permute.xlu0 %34
    %vm36 = vcmask 7168
    %s37 = scalar_lea.vmem %s1, 5
    %38 = vst.msk [vmem:[%s37] ss:$8 sm:$0xf] %vm36, %v35
    %v39 = vld [vmem:[#allocation0] sm:$0xf]
    %40 = vrot.lane.b32.xlu0 %v39, 122
    %v41 = vpop.permute.xlu0 %40
    %vm42 = vcmask 7168
    %s43 = scalar_lea.vmem %s1, 6
    %44 = vst.msk [vmem:[%s43] ss:$8 sm:$0xf] %vm42, %v41
    %v45 = vld [vmem:[#allocation0] sm:$0xf]
    %46 = vrot.lane.b32.xlu0 %v45, 121
    %v47 = vpop.permute.xlu0 %46
    %vm48 = vcmask 7168
    %s49 = scalar_lea.vmem %s1, 7
    %50 = vst.msk [vmem:[%s49] ss:$8 sm:$0xf] %vm48, %v47

// kernel: tile.8
$region0: #{tile.8}
  #allocation2 [shape = 's32[1]{0}', space=sflag, size = 0x4, scoped, tag = 'scoped memory for tile.8']
  %s0 = inlined_call_operand.hbm [shape: f32[8], index: 0, kind: input, shape index: {}]
  %s1 = inlined_call_operand.vmem [shape: f32[4,8], index: 1, kind: output, shape index: {}]
  $region1: #{tile.8} parent=0
    #allocation0 [shape = 'u8[512]{0}', space=vmem, size = 0x400, scoped, tag = 'operand span for operand 0']
    #allocation1 [shape = 's32[1]{0}', space=sflag, size = 0x4, scoped, tag = 'scoped memory for tile.8']
    %2 = vsyncpa [#allocation1], 0
    // Predicated region
    $region2: #{tile.8} parent=1 // pred_check
      _
    $region3: #{tile.8} parent=1 // pred_check_branch
      %4 = sbr.rel (0) target = $region5
    $region4: #{tile.8} parent=1 // pred_region
      %6 = vsyncadd [#allocation1], 0
      %s8 = sshll.u32 %s0, 4
      %s9 = int_to_ptr.hbm [resolvable:$true] %s8
      %s10 = sshll.u32 [#allocation0], 4
      %s11 = int_to_ptr.vmem [resolvable:$true] %s10
      %13 = dma.hbm_to_vmem [thread:$0]  %s9, 16, %s11, [#allocation1]
    $region5: #{tile.8} parent=1 // pred_fallthru
      _
    // Predicated region
    $region6: #{tile.8} parent=1 // pred_check
      _
    $region7: #{tile.8} parent=1 // pred_check_branch
      %15 = sbr.rel (0) target = $region9
    $region8: #{tile.8} parent=1 // pred_region
      %17 = dma.done [#allocation1], 16
    $region9: #{tile.8} parent=1 // pred_fallthru
      _
    %v18 = vld [vmem:[#allocation0] ss:$0 sm:$0xff]
    %19 = vst [vmem:[%s1] sm:$0xf] %v18
    %20 = vsyncpa [#allocation1], 1

// kernel: up_split_forward.1
$region0: #{up_split_forward.1}
  #allocation0 [shape = 'u32[]', space=smem, size = 0x4, offset = 0x4, fixed_abs, tag = 'smem constant byte address 0x4 - core index']
  #allocation1 [shape = 'u32[72,128]{1,0:T(1,128)}', space=vmem, size = 0x9000, scoped, tag = 'internal scratch']
  %s0 = inlined_call_operand.vmem [shape: f32[2,6,16,256], index: 0, kind: input, shape index: {}]
  %s1 = inlined_call_operand.vmem [shape: f32[3,32,16], index: 1, kind: input, shape index: {}]
  %s2 = inlined_call_operand.vmem [shape: f32[32,1], index: 2, kind: input, shape index: {}]
  %s3 = inlined_call_operand.vmem [shape: f32[2,4,32,256], index: 3, kind: output, shape index: {}]
  %s4 = sld [smem:[#allocation0]]
  $region45: #{up_split_forward.1} parent=0
    _
  %s6 = ssub.s32 1, %s4
  %s7 = scalar_select 0, %s6, %s4
  loop: start=0, step=1, limit=4
  $region2: #{up_split_forward.1} parent=0 // loop_pre_header
    _
  $region3: #{up_split_forward.1} parent=0 // loop_header
    %s9 = sphi 0, %s13
    %p10 = scmp.ge.s32.totalorder %s9, 4
    %s16 = sphi 0, %s35
    %s17 = sphi 0, %s31
    %s18 = sphi 0, %s27
    %s19 = sphi 0, %s16
    %s20 = sphi 0, %s17
    %s21 = sphi 0, %s18
    %s22 = sphi 0, %s19
    %s23 = sphi 0, %s20
    %s24 = sphi 0, %s21
    %s40 = sphi 0, %s42
    %s43 = sphi 0, %s40
    %s44 = sphi 0, %s43
    %s60 = sphi 0, %s44
    %s64 = sphi 0, %s64
    %s66 = sphi 0, %s64
    %s67 = sphi 0, %s66
    %s81 = sphi 0, %s67
    %s85 = sphi 0, %s85
    %s87 = sphi 0, %s85
    %s88 = sphi 0, %s87
    %s102 = sphi 0, %s88
    %s112 = sphi 0, %s114
    %s115 = sphi 0, %s112
    %s116 = sphi 0, %s115
    %s132 = sphi 0, %s116
  $region4: #{up_split_forward.1} parent=0 // loop_header_branch
    %12 = sbr.rel (%p10) target = $region8
  $region5: #{up_split_forward.1} parent=0 // loop_body
    %s14 = ssub.s32 %s9, 1
    %s15 = ssub.s32 %s9, 2
    %s25 = sadd.s32 1, %s18
    %p26 = scmp.ge.s32.totalorder %s25, 1
    %s27 = scalar_select %p26, 0, %s25
    %s28 = sadd.s32 1, %s17
    %s29 = scalar_select %p26, %s28, %s17
    %p30 = scmp.ge.s32.totalorder %s29, 1
    %s31 = scalar_select %p30, 0, %s29
    %s32 = sadd.s32 1, %s16
    %s33 = scalar_select %p30, %s32, %s16
    %p34 = scmp.ge.s32.totalorder %s33, 2
    %s35 = scalar_select %p34, 0, %s33
    %s36 = ssub.s32 %s16, %s35
    %s37 = ssub.s32 %s17, %s31
    %s38 = sor.u32 %s36, %s37
    %p39 = scmp.eq.s32.totalorder %s38, 0
    %s41 = sadd.s32 %s40, 1
    %s42 = scalar_select %p39, %s40, %s41
    %p45 = pneg %p39
    %p46 = scmp.eq.s32.totalorder %s9, 1
    %p47 = por %p45, %p46
    %p48 = scmp.ne.s32.totalorder %s40, %s43
    %p49 = scmp.eq.s32.totalorder %s9, 0
    %p50 = por %p48, %p49
    %p51 = scmp.ne.s32.totalorder %s40, %s43
    %p52 = scmp.eq.s32.totalorder %s14, 1
    %p53 = por %p51, %p52
    %p54 = scmp.ne.s32.totalorder %s43, %s44
    %p55 = scmp.eq.s32.totalorder %s14, 0
    %p56 = por %p54, %p55
    %p57 = scmp.ne.s32.totalorder %s43, %s44
    %p58 = scmp.eq.s32.totalorder %s15, 1
    %p59 = por %p57, %p58
    %p61 = scmp.ne.s32.totalorder %s44, %s60
    %p62 = scmp.eq.s32.totalorder %s15, 0
    %p63 = por %p61, %p62
    %s65 = sadd.s32 %s64, 1
    %p68 = scmp.eq.s32.totalorder %s9, 1
    %p69 = scmp.ne.s32.totalorder %s64, %s66
    %p70 = scmp.eq.s32.totalorder %s9, 0
    %p71 = por %p69, %p70
    %p72 = scmp.ne.s32.totalorder %s64, %s66
    %p73 = scmp.eq.s32.totalorder %s14, 1
    %p74 = por %p72, %p73
    %p75 = scmp.ne.s32.totalorder %s66, %s67
    %p76 = scmp.eq.s32.totalorder %s14, 0
    %p77 = por %p75, %p76
    %p78 = scmp.ne.s32.totalorder %s66, %s67
    %p79 = scmp.eq.s32.totalorder %s15, 1
    %p80 = por %p78, %p79
    %p82 = scmp.ne.s32.totalorder %s67, %s81
    %p83 = scmp.eq.s32.totalorder %s15, 0
    %p84 = por %p82, %p83
    %s86 = sadd.s32 %s85, 1
    %p89 = scmp.eq.s32.totalorder %s9, 1
    %p90 = scmp.ne.s32.totalorder %s85, %s87
    %p91 = scmp.eq.s32.totalorder %s9, 0
    %p92 = por %p90, %p91
    %p93 = scmp.ne.s32.totalorder %s85, %s87
    %p94 = scmp.eq.s32.totalorder %s14, 1
    %p95 = por %p93, %p94
    %p96 = scmp.ne.s32.totalorder %s87, %s88
    %p97 = scmp.eq.s32.totalorder %s14, 0
    %p98 = por %p96, %p97
    %p99 = scmp.ne.s32.totalorder %s87, %s88
    %p100 = scmp.eq.s32.totalorder %s15, 1
    %p101 = por %p99, %p100
    %p103 = scmp.ne.s32.totalorder %s88, %s102
    %p104 = scmp.eq.s32.totalorder %s15, 0
    %p105 = por %p103, %p104
    %s106 = ssub.s32 %s16, %s35
    %s107 = ssub.s32 %s18, %s27
    %s108 = sor.u32 %s106, %s107
    %s109 = ssub.s32 %s17, %s31
    %s110 = sor.u32 %s108, %s109
    %p111 = scmp.eq.s32.totalorder %s110, 0
    %s113 = sadd.s32 %s112, 1
    %s114 = scalar_select %p111, %s112, %s113
    %p117 = pneg %p111
    %p118 = scmp.eq.s32.totalorder %s9, 1
    %p119 = por %p117, %p118
    %p120 = scmp.ne.s32.totalorder %s112, %s115
    %p121 = scmp.eq.s32.totalorder %s9, 0
    %p122 = por %p120, %p121
    %p123 = scmp.ne.s32.totalorder %s112, %s115
    %p124 = scmp.eq.s32.totalorder %s14, 1
    %p125 = por %p123, %p124
    %p126 = scmp.ne.s32.totalorder %s115, %s116
    %p127 = scmp.eq.s32.totalorder %s14, 0
    %p128 = por %p126, %p127
    %p129 = scmp.ne.s32.totalorder %s115, %s116
    %p130 = scmp.eq.s32.totalorder %s15, 1
    %p131 = por %p129, %p130
    %p133 = scmp.ne.s32.totalorder %s116, %s132
    %p134 = scmp.eq.s32.totalorder %s15, 0
    %p135 = por %p133, %p134
    %p136 = scmp.le.s32.totalorder 1, %s9
    %p137 = scmp.lt.s32.totalorder %s9, 3
    %p138 = pnand %p136, %p137
    %p139 = pneg %p138
    // Predicated region
    $region9: #{up_split_forward.1} parent=5 // pred_check
      _
    $region10: #{up_split_forward.1} parent=5 // pred_check_branch
      %141 = sbr.rel (%p138) target = $region12
    $region11: #{up_split_forward.1} parent=5 // pred_region
      %s142 = ssub.s32 %s9, 1
      // Predicated region
      $region13: #{up_split_forward.1} parent=11 // pred_check
        %p143 = pneg %p77
      $region14: #{up_split_forward.1} parent=11 // pred_check_branch
        %145 = sbr.rel (%p143) target = $region16
      $region15: #{up_split_forward.1} parent=11 // pred_region
        _
      $region16: #{up_split_forward.1} parent=11 // pred_fallthru
        _
      // Predicated region
      $region17: #{up_split_forward.1} parent=11 // pred_check
        %p146 = pneg %p98
      $region18: #{up_split_forward.1} parent=11 // pred_check_branch
        %148 = sbr.rel (%p146) target = $region20
      $region19: #{up_split_forward.1} parent=11 // pred_region
        _
      $region20: #{up_split_forward.1} parent=11 // pred_fallthru
        _
    $region12: #{up_split_forward.1} parent=5 // pred_fallthru
      _
    %p149 = scmp.lt.s32.totalorder %s9, 2
    // Predicated region
    $region21: #{up_split_forward.1} parent=5 // pred_check
      %p150 = pneg %p149
    $region22: #{up_split_forward.1} parent=5 // pred_check_branch
      %152 = sbr.rel (%p150) target = $region24
    $region23: #{up_split_forward.1} parent=5 // pred_region
      // Predicated region
      $region25: #{up_split_forward.1} parent=23 // pred_check
        %p153 = pneg %p50
      $region26: #{up_split_forward.1} parent=23 // pred_check_branch
        %155 = sbr.rel (%p153) target = $region28
      $region27: #{up_split_forward.1} parent=23 // pred_region
        %s156 = smul.u32 2, %s17
        %p157 = scmp.lt.s32.totalorder %s16, 1
        %s158 = scalar_select %p157, %s16, 1
        %p159 = scmp.lt.s32.totalorder %s156, 1
        %s160 = scalar_select %p159, %s156, 1
        %s161 = smul.addr %s158, 24
        %s162 = sadd.s32 %s160, %s161
        %s163 = smul.addr %s162, 8
        %s164 = scalar_lea.vmem %s0, %s163
        %s165 = smul.u32 2, %s17
      $region28: #{up_split_forward.1} parent=23 // pred_fallthru
        _
    $region24: #{up_split_forward.1} parent=5 // pred_fallthru
      _
    %p166 = scmp.le.s32.totalorder 1, %s9
    %p167 = scmp.lt.s32.totalorder %s9, 3
    %p168 = pnand %p166, %p167
    %p169 = pneg %p168
    // Predicated region
    $region29: #{up_split_forward.1} parent=5 // pred_check
      _
    $region30: #{up_split_forward.1} parent=5 // pred_check_branch
      %171 = sbr.rel (%p168) target = $region32
    $region31: #{up_split_forward.1} parent=5 // pred_region
      %s172 = ssub.s32 %s9, 1
      %s173 = smul.u32 2, %s20
      %p174 = scmp.lt.s32.totalorder %s19, 1
      %s175 = scalar_select %p174, %s19, 1
      %p176 = scmp.lt.s32.totalorder %s173, 1
      %s177 = scalar_select %p176, %s173, 1
      %s178 = smul.addr %s175, 24
      %s179 = sadd.s32 %s177, %s178
      %s180 = smul.addr %s179, 8
      %s181 = scalar_lea.vmem %s0, %s180
      %p182 = pneg %p56
      %p183 = pneg %p53
      %p184 = pneg %p77
      %p185 = pneg %p74
      %p186 = pneg %p98
      %p187 = pneg %p95
      %p188 = pneg %p128
      %p189 = pneg %p125
      %s190 = smul.u32 4, %s21
      %s191 = smul.u32 2, %s20
      %p192 = scmp.lt.s32.totalorder %s19, 1
      %s193 = scalar_select %p192, %s19, 1
      %p194 = scmp.lt.s32.totalorder %s190, 3
      %s195 = scalar_select %p194, %s190, 3
      %p196 = scmp.lt.s32.totalorder %s191, 1
      %s197 = scalar_select %p196, %s191, 1
      %s198 = smul.addr %s195, 8
      %s199 = sadd.s32 %s197, %s198
      %s200 = smul.addr %s193, 32
      %s201 = sadd.s32 %s199, %s200
      %s202 = smul.addr %s201, 8
      %s203 = scalar_lea.vmem %s3, %s202
      %s204 = smul.u32 2, %s20
      %p205 = scmp.lt.s32.totalorder %s19, 1
      %s206 = scalar_select %p205, %s19, 1
      %p207 = scmp.lt.s32.totalorder %s204, 1
      %s208 = scalar_select %p207, %s204, 1
      %s209 = smul.addr %s206, 24
      %s210 = sadd.s32 %s208, %s209
      %s211 = smul.addr %s210, 8
      %s212 = scalar_lea.vmem %s0, %s211
      %s213 = smul.u32 2, %s20
      %s214 = smul.u32 4, %s21
      %s215 = smul.u32 2, %s20
      %p216 = scmp.lt.s32.totalorder %s19, 1
      %s217 = scalar_select %p216, %s19, 1
      %p218 = scmp.lt.s32.totalorder %s214, 3
      %s219 = scalar_select %p218, %s214, 3
      %p220 = scmp.lt.s32.totalorder %s215, 1
      %s221 = scalar_select %p220, %s215, 1
      %s222 = smul.addr %s219, 8
      %s223 = sadd.s32 %s221, %s222
      %s224 = smul.addr %s217, 32
      %s225 = sadd.s32 %s223, %s224
      %s226 = smul.addr %s225, 8
      %s227 = scalar_lea.vmem %s3, %s226
      %s228 = smul.u32 4, %s21
      %s229 = smul.u32 2, %s20
      %s230 = smul.u32 %s21, 4
      %s231 = smul.u32 %s230, 4
      %s232 = smul.addr %s231, 8
      %s233 = scalar_lea.vmem %s212, %s232
      %v234 = vld [vmem:[%s233] sm:$0xff]
      %v235 = vld [vmem:[%s233 + $0x8] sm:$0xff]
      %v236 = vld [vmem:[%s233 + $0x10] sm:$0xff]
      %v237 = vld [vmem:[%s233 + $0x18] sm:$0xff]
      %v238 = vld [vmem:[%s1] sm:$0xff]
      %v239 = vld [vmem:[%s1 + $0x8] sm:$0xff]
      %v240 = vld [vmem:[%s1 + $0x10] sm:$0xff]
      %v241 = vld [vmem:[%s1 + $0x18] sm:$0xff]
      %s242 = sadd.s32 %s230, 1
      %s243 = smul.u32 %s242, 4
      %s244 = smul.addr %s243, 8
      %s245 = scalar_lea.vmem %s212, %s244
      %v246 = vld [vmem:[%s245] sm:$0xff]
      %v247 = vld [vmem:[%s245 + $0x8] sm:$0xff]
      %v248 = vld [vmem:[%s245 + $0x10] sm:$0xff]
      %v249 = vld [vmem:[%s245 + $0x18] sm:$0xff]
      %s250 = scalar_lea.vmem %s1, 32
      %v251 = vld [vmem:[%s250] sm:$0xff]
      %v252 = vld [vmem:[%s250 + $0x8] sm:$0xff]
      %v253 = vld [vmem:[%s250 + $0x10] sm:$0xff]
      %v254 = vld [vmem:[%s250 + $0x18] sm:$0xff]
      %vm255 = vcmask 130048
      %v257 = vsel %vm255, %v251, 0
      %v260 = vsel %vm255, %v252, 0
      %v263 = vsel %vm255, %v253, 0
      %v266 = vsel %vm255, %v254, 0
      %268 = vmatpush.msra.mxu0 0.0
      %269 = vmatpush.msra.mxu0 0.0
      %270 = vmatpush.msra.mxu0 0.0
      %271 = vmatpush.msra.mxu0 0.0
      %272 = vmatpush.msra.mxu0 0.0
      %273 = vmatpush.msra.mxu0 0.0
      %274 = vmatpush.msra.mxu0 0.0
      %275 = vmatpush.msra.mxu0 0.0
      %276 = vmatpush.msra.mxu0 0.0
      %277 = vmatpush.msra.mxu0 0.0
      %278 = vmatpush.msra.mxu0 0.0
      %279 = vmatpush.msra.mxu0 0.0
      %280 = vmatpush.msra.mxu0 0.0
      %281 = vmatpush.msra.mxu0 0.0
      %282 = vmatpush.msra.mxu0 %v248
      %283 = vmatpush.msra.mxu0 %v246
      %284 = vmatmul.f32.gmra.mxu0 %v257
      %v285 = vpop.f32.mrf.mxu0
      %v286 = vadd.f32 0.0, %v285
      %287 = vmatmul.f32.gmra.mxu0 %v260
      %v288 = vpop.f32.mrf.mxu0
      %v289 = vadd.f32 0.0, %v288
      %290 = vmatmul.f32.gmra.mxu0 %v263
      %v291 = vpop.f32.mrf.mxu0
      %v292 = vadd.f32 0.0, %v291
      %293 = vmatmul.f32.gmra.mxu0 %v266
      %v294 = vpop.f32.mrf.mxu0
      %v295 = vadd.f32 0.0, %v294
      %296 = vdwg.mxu0
      %297 = vmatpush.msra.mxu0 0.0
      %298 = vmatpush.msra.mxu0 0.0
      %299 = vmatpush.msra.mxu0 0.0
      %300 = vmatpush.msra.mxu0 0.0
      %301 = vmatpush.msra.mxu0 0.0
      %302 = vmatpush.msra.mxu0 0.0
      %303 = vmatpush.msra.mxu0 0.0
      %304 = vmatpush.msra.mxu0 0.0
      %305 = vmatpush.msra.mxu0 0.0
      %306 = vmatpush.msra.mxu0 0.0
      %307 = vmatpush.msra.mxu0 0.0
      %308 = vmatpush.msra.mxu0 0.0
      %309 = vmatpush.msra.mxu0 0.0
      %310 = vmatpush.msra.mxu0 0.0
      %311 = vmatpush.msra.mxu0 %v249
      %312 = vmatpush.msra.mxu0 %v247
      %313 = vmatmul.f32.gmra.mxu0 %v257
      %v314 = vpop.f32.mrf.mxu0
      %v315 = vadd.f32 0.0, %v314
      %316 = vmatmul.f32.gmra.mxu0 %v260
      %v317 = vpop.f32.mrf.mxu0
      %v318 = vadd.f32 0.0, %v317
      %319 = vmatmul.f32.gmra.mxu0 %v263
      %v320 = vpop.f32.mrf.mxu0
      %v321 = vadd.f32 0.0, %v320
      %322 = vmatmul.f32.gmra.mxu0 %v266
      %v323 = vpop.f32.mrf.mxu0
      %v324 = vadd.f32 0.0, %v323
      %325 = vdwg.mxu0
      %v327 = vsel %vm255, %v238, 0
      %v330 = vsel %vm255, %v239, 0
      %v333 = vsel %vm255, %v240, 0
      %v336 = vsel %vm255, %v241, 0
      %338 = vmatpush.msra.mxu0 0.0
      %339 = vmatpush.msra.mxu0 0.0
      %340 = vmatpush.msra.mxu0 0.0
      %341 = vmatpush.msra.mxu0 0.0
      %342 = vmatpush.msra.mxu0 0.0
      %343 = vmatpush.msra.mxu0 0.0
      %344 = vmatpush.msra.mxu0 0.0
      %345 = vmatpush.msra.mxu0 0.0
      %346 = vmatpush.msra.mxu0 0.0
      %347 = vmatpush.msra.mxu0 0.0
      %348 = vmatpush.msra.mxu0 0.0
      %349 = vmatpush.msra.mxu0 0.0
      %350 = vmatpush.msra.mxu0 0.0
      %351 = vmatpush.msra.mxu0 0.0
      %352 = vmatpush.msra.mxu0 %v236
      %353 = vmatpush.msra.mxu0 %v234
      %354 = vmatmul.f32.gmra.mxu0 %v327
      %v355 = vpop.f32.mrf.mxu0
      %v356 = vadd.f32 %v286, %v355
      %357 = vmatmul.f32.gmra.mxu0 %v330
      %v358 = vpop.f32.mrf.mxu0
      %v359 = vadd.f32 %v289, %v358
      %360 = vmatmul.f32.gmra.mxu0 %v333
      %v361 = vpop.f32.mrf.mxu0
      %v362 = vadd.f32 %v292, %v361
      %363 = vmatmul.f32.gmra.mxu0 %v336
      %v364 = vpop.f32.mrf.mxu0
      %v365 = vadd.f32 %v295, %v364
      %366 = vdwg.mxu0
      %367 = vmatpush.msra.mxu0 0.0
      %368 = vmatpush.msra.mxu0 0.0
      %369 = vmatpush.msra.mxu0 0.0
      %370 = vmatpush.msra.mxu0 0.0
      %371 = vmatpush.msra.mxu0 0.0
      %372 = vmatpush.msra.mxu0 0.0
      %373 = vmatpush.msra.mxu0 0.0
      %374 = vmatpush.msra.mxu0 0.0
      %375 = vmatpush.msra.mxu0 0.0
      %376 = vmatpush.msra.mxu0 0.0
      %377 = vmatpush.msra.mxu0 0.0
      %378 = vmatpush.msra.mxu0 0.0
      %379 = vmatpush.msra.mxu0 0.0
      %380 = vmatpush.msra.mxu0 0.0
      %381 = vmatpush.msra.mxu0 %v237
      %382 = vmatpush.msra.mxu0 %v235
      %383 = vmatmul.f32.gmra.mxu0 %v327
      %v384 = vpop.f32.mrf.mxu0
      %v385 = vadd.f32 %v315, %v384
      %386 = vmatmul.f32.gmra.mxu0 %v330
      %v387 = vpop.f32.mrf.mxu0
      %v388 = vadd.f32 %v318, %v387
      %389 = vmatmul.f32.gmra.mxu0 %v333
      %v390 = vpop.f32.mrf.mxu0
      %v391 = vadd.f32 %v321, %v390
      %392 = vmatmul.f32.gmra.mxu0 %v336
      %v393 = vpop.f32.mrf.mxu0
      %v394 = vadd.f32 %v324, %v393
      %395 = vdwg.mxu0
      %s396 = sadd.s32 %s230, 2
      %s397 = smul.u32 %s396, 4
      %s398 = smul.addr %s397, 8
      %s399 = scalar_lea.vmem %s212, %s398
      %v400 = vld [vmem:[%s399] sm:$0xff]
      %v401 = vld [vmem:[%s399 + $0x8] sm:$0xff]
      %v402 = vld [vmem:[%s399 + $0x10] sm:$0xff]
      %v403 = vld [vmem:[%s399 + $0x18] sm:$0xff]
      %s404 = scalar_lea.vmem %s1, 64
      %v405 = vld [vmem:[%s404] sm:$0xff]
      %v406 = vld [vmem:[%s404 + $0x8] sm:$0xff]
      %v407 = vld [vmem:[%s404 + $0x10] sm:$0xff]
      %v408 = vld [vmem:[%s404 + $0x18] sm:$0xff]
      %v410 = vsel %vm255, %v405, 0
      %v413 = vsel %vm255, %v406, 0
      %v416 = vsel %vm255, %v407, 0
      %v419 = vsel %vm255, %v408, 0
      %421 = vmatpush.msra.mxu0 0.0
      %422 = vmatpush.msra.mxu0 0.0
      %423 = vmatpush.msra.mxu0 0.0
      %424 = vmatpush.msra.mxu0 0.0
      %425 = vmatpush.msra.mxu0 0.0
      %426 = vmatpush.msra.mxu0 0.0
      %427 = vmatpush.msra.mxu0 0.0
      %428 = vmatpush.msra.mxu0 0.0
      %429 = vmatpush.msra.mxu0 0.0
      %430 = vmatpush.msra.mxu0 0.0
      %431 = vmatpush.msra.mxu0 0.0
      %432 = vmatpush.msra.mxu0 0.0
      %433 = vmatpush.msra.mxu0 0.0
      %434 = vmatpush.msra.mxu0 0.0
      %435 = vmatpush.msra.mxu0 %v402
      %436 = vmatpush.msra.mxu0 %v400
      %437 = vmatmul.f32.gmra.mxu0 %v410
      %v438 = vpop.f32.mrf.mxu0
      %v439 = vadd.f32 0.0, %v438
      %440 = vmatmul.f32.gmra.mxu0 %v413
      %v441 = vpop.f32.mrf.mxu0
      %v442 = vadd.f32 0.0, %v441
      %443 = vmatmul.f32.gmra.mxu0 %v416
      %v444 = vpop.f32.mrf.mxu0
      %v445 = vadd.f32 0.0, %v444
      %446 = vmatmul.f32.gmra.mxu0 %v419
      %v447 = vpop.f32.mrf.mxu0
      %v448 = vadd.f32 0.0, %v447
      %449 = vdwg.mxu0
      %450 = vmatpush.msra.mxu0 0.0
      %451 = vmatpush.msra.mxu0 0.0
      %452 = vmatpush.msra.mxu0 0.0
      %453 = vmatpush.msra.mxu0 0.0
      %454 = vmatpush.msra.mxu0 0.0
      %455 = vmatpush.msra.mxu0 0.0
      %456 = vmatpush.msra.mxu0 0.0
      %457 = vmatpush.msra.mxu0 0.0
      %458 = vmatpush.msra.mxu0 0.0
      %459 = vmatpush.msra.mxu0 0.0
      %460 = vmatpush.msra.mxu0 0.0
      %461 = vmatpush.msra.mxu0 0.0
      %462 = vmatpush.msra.mxu0 0.0
      %463 = vmatpush.msra.mxu0 0.0
      %464 = vmatpush.msra.mxu0 %v403
      %465 = vmatpush.msra.mxu0 %v401
      %466 = vmatmul.f32.gmra.mxu0 %v410
      %v467 = vpop.f32.mrf.mxu0
      %v468 = vadd.f32 0.0, %v467
      %469 = vmatmul.f32.gmra.mxu0 %v413
      %v470 = vpop.f32.mrf.mxu0
      %v471 = vadd.f32 0.0, %v470
      %472 = vmatmul.f32.gmra.mxu0 %v416
      %v473 = vpop.f32.mrf.mxu0
      %v474 = vadd.f32 0.0, %v473
      %475 = vmatmul.f32.gmra.mxu0 %v419
      %v476 = vpop.f32.mrf.mxu0
      %v477 = vadd.f32 0.0, %v476
      %478 = vdwg.mxu0
      %v479 = vadd.f32 %v356, %v439
      %v480 = vadd.f32 %v385, %v468
      %v481 = vadd.f32 %v359, %v442
      %v482 = vadd.f32 %v388, %v471
      %v483 = vadd.f32 %v362, %v445
      %v484 = vadd.f32 %v391, %v474
      %v485 = vadd.f32 %v365, %v448
      %v486 = vadd.f32 %v394, %v477
      %v487 = vld [vmem:[%s2] sm:$0xff]
      %v488 = vld [vmem:[%s2 + $0x8] sm:$0xff]
      %v489 = vld [vmem:[%s2 + $0x10] sm:$0xff]
      %v490 = vld [vmem:[%s2 + $0x18] sm:$0xff]
      %492 = vset.pattern.permute.xlu0 0
      %493 = vperm.xlu0 %492, %v487
      %v494 = vpop.permute.xlu0 %493
      %497 = vset.pattern.permute.xlu0 0
      %498 = vperm.xlu0 %497, %v488
      %v499 = vpop.permute.xlu0 %498
      %502 = vset.pattern.permute.xlu0 0
      %503 = vperm.xlu0 %502, %v489
      %v504 = vpop.permute.xlu0 %503
      %507 = vset.pattern.permute.xlu0 0
      %508 = vperm.xlu0 %507, %v490
      %v509 = vpop.permute.xlu0 %508
      %v511 = vadd.f32 %v479, %v494
      %v512 = vadd.f32 %v480, %v494
      %v513 = vadd.f32 %v481, %v499
      %v514 = vadd.f32 %v482, %v499
      %v515 = vadd.f32 %v483, %v504
      %v516 = vadd.f32 %v484, %v504
      %v517 = vadd.f32 %v485, %v509
      %v518 = vadd.f32 %v486, %v509
      %519 = vst [vmem:[%s227] sm:$0xff] %v511
      %520 = vst [vmem:[%s227 + $0x8] sm:$0xff] %v512
      %521 = vst [vmem:[%s227 + $0x10] sm:$0xff] %v513
      %522 = vst [vmem:[%s227 + $0x18] sm:$0xff] %v514
      %523 = vst [vmem:[%s227 + $0x20] sm:$0xff] %v515
      %524 = vst [vmem:[%s227 + $0x28] sm:$0xff] %v516
      %525 = vst [vmem:[%s227 + $0x30] sm:$0xff] %v517
      %526 = vst [vmem:[%s227 + $0x38] sm:$0xff] %v518
      %v527 = vld [vmem:[%s245] sm:$0xff]
      %v528 = vld [vmem:[%s245 + $0x8] sm:$0xff]
      %v529 = vld [vmem:[%s245 + $0x10] sm:$0xff]
      %v530 = vld [vmem:[%s245 + $0x18] sm:$0xff]
      %v531 = vld [vmem:[%s1] sm:$0xff]
      %v532 = vld [vmem:[%s1 + $0x8] sm:$0xff]
      %v533 = vld [vmem:[%s1 + $0x10] sm:$0xff]
      %v534 = vld [vmem:[%s1 + $0x18] sm:$0xff]
      %v535 = vld [vmem:[%s399] sm:$0xff]
      %v536 = vld [vmem:[%s399 + $0x8] sm:$0xff]
      %v537 = vld [vmem:[%s399 + $0x10] sm:$0xff]
      %v538 = vld [vmem:[%s399 + $0x18] sm:$0xff]
      %v539 = vld [vmem:[%s250] sm:$0xff]
      %v540 = vld [vmem:[%s250 + $0x8] sm:$0xff]
      %v541 = vld [vmem:[%s250 + $0x10] sm:$0xff]
      %v542 = vld [vmem:[%s250 + $0x18] sm:$0xff]
      %v544 = vsel %vm255, %v539, 0
      %v547 = vsel %vm255, %v540, 0
      %v550 = vsel %vm255, %v541, 0
      %v553 = vsel %vm255, %v542, 0
      %555 = vmatpush.msra.mxu0 0.0
      %556 = vmatpush.msra.mxu0 0.0
      %557 = vmatpush.msra.mxu0 0.0
      %558 = vmatpush.msra.mxu0 0.0
      %559 = vmatpush.msra.mxu0 0.0
      %560 = vmatpush.msra.mxu0 0.0
      %561 = vmatpush.msra.mxu0 0.0
      %562 = vmatpush.msra.mxu0 0.0
      %563 = vmatpush.msra.mxu0 0.0
      %564 = vmatpush.msra.mxu0 0.0
      %565 = vmatpush.msra.mxu0 0.0
      %566 = vmatpush.msra.mxu0 0.0
      %567 = vmatpush.msra.mxu0 0.0
      %568 = vmatpush.msra.mxu0 0.0
      %569 = vmatpush.msra.mxu0 %v537
      %570 = vmatpush.msra.mxu0 %v535
      %571 = vmatmul.f32.gmra.mxu0 %v544
      %v572 = vpop.f32.mrf.mxu0
      %v573 = vadd.f32 0.0, %v572
      %574 = vmatmul.f32.gmra.mxu0 %v547
      %v575 = vpop.f32.mrf.mxu0
      %v576 = vadd.f32 0.0, %v575
      %577 = vmatmul.f32.gmra.mxu0 %v550
      %v578 = vpop.f32.mrf.mxu0
      %v579 = vadd.f32 0.0, %v578
      %580 = vmatmul.f32.gmra.mxu0 %v553
      %v581 = vpop.f32.mrf.mxu0
      %v582 = vadd.f32 0.0, %v581
      %583 = vdwg.mxu0
      %584 = vmatpush.msra.mxu0 0.0
      %585 = vmatpush.msra.mxu0 0.0
      %586 = vmatpush.msra.mxu0 0.0
      %587 = vmatpush.msra.mxu0 0.0
      %588 = vmatpush.msra.mxu0 0.0
      %589 = vmatpush.msra.mxu0 0.0
      %590 = vmatpush.msra.mxu0 0.0
      %591 = vmatpush.msra.mxu0 0.0
      %592 = vmatpush.msra.mxu0 0.0
      %593 = vmatpush.msra.mxu0 0.0
      %594 = vmatpush.msra.mxu0 0.0
      %595 = vmatpush.msra.mxu0 0.0
      %596 = vmatpush.msra.mxu0 0.0
      %597 = vmatpush.msra.mxu0 0.0
      %598 = vmatpush.msra.mxu0 %v538
      %599 = vmatpush.msra.mxu0 %v536
      %600 = vmatmul.f32.gmra.mxu0 %v544
      %v601 = vpop.f32.mrf.mxu0
      %v602 = vadd.f32 0.0, %v601
      %603 = vmatmul.f32.gmra.mxu0 %v547
      %v604 = vpop.f32.mrf.mxu0
      %v605 = vadd.f32 0.0, %v604
      %606 = vmatmul.f32.gmra.mxu0 %v550
      %v607 = vpop.f32.mrf.mxu0
      %v608 = vadd.f32 0.0, %v607
      %609 = vmatmul.f32.gmra.mxu0 %v553
      %v610 = vpop.f32.mrf.mxu0
      %v611 = vadd.f32 0.0, %v610
      %612 = vdwg.mxu0
      %v614 = vsel %vm255, %v531, 0
      %v617 = vsel %vm255, %v532, 0
      %v620 = vsel %vm255, %v533, 0
      %v623 = vsel %vm255, %v534, 0
      %625 = vmatpush.msra.mxu0 0.0
      %626 = vmatpush.msra.mxu0 0.0
      %627 = vmatpush.msra.mxu0 0.0
      %628 = vmatpush.msra.mxu0 0.0
      %629 = vmatpush.msra.mxu0 0.0
      %630 = vmatpush.msra.mxu0 0.0
      %631 = vmatpush.msra.mxu0 0.0
      %632 = vmatpush.msra.mxu0 0.0
      %633 = vmatpush.msra.mxu0 0.0
      %634 = vmatpush.msra.mxu0 0.0
      %635 = vmatpush.msra.mxu0 0.0
      %636 = vmatpush.msra.mxu0 0.0
      %637 = vmatpush.msra.mxu0 0.0
      %638 = vmatpush.msra.mxu0 0.0
      %639 = vmatpush.msra.mxu0 %v529
      %640 = vmatpush.msra.mxu0 %v527
      %641 = vmatmul.f32.gmra.mxu0 %v614
      %v642 = vpop.f32.mrf.mxu0
      %v643 = vadd.f32 %v573, %v642
      %644 = vmatmul.f32.gmra.mxu0 %v617
      %v645 = vpop.f32.mrf.mxu0
      %v646 = vadd.f32 %v576, %v645
      %647 = vmatmul.f32.gmra.mxu0 %v620
      %v648 = vpop.f32.mrf.mxu0
      %v649 = vadd.f32 %v579, %v648
      %650 = vmatmul.f32.gmra.mxu0 %v623
      %v651 = vpop.f32.mrf.mxu0
      %v652 = vadd.f32 %v582, %v651
      %653 = vdwg.mxu0
      %654 = vmatpush.msra.mxu0 0.0
      %655 = vmatpush.msra.mxu0 0.0
      %656 = vmatpush.msra.mxu0 0.0
      %657 = vmatpush.msra.mxu0 0.0
      %658 = vmatpush.msra.mxu0 0.0
      %659 = vmatpush.msra.mxu0 0.0
      %660 = vmatpush.msra.mxu0 0.0
      %661 = vmatpush.msra.mxu0 0.0
      %662 = vmatpush.msra.mxu0 0.0
      %663 = vmatpush.msra.mxu0 0.0
      %664 = vmatpush.msra.mxu0 0.0
      %665 = vmatpush.msra.mxu0 0.0
      %666 = vmatpush.msra.mxu0 0.0
      %667 = vmatpush.msra.mxu0 0.0
      %668 = vmatpush.msra.mxu0 %v530
      %669 = vmatpush.msra.mxu0 %v528
      %670 = vmatmul.f32.gmra.mxu0 %v614
      %v671 = vpop.f32.mrf.mxu0
      %v672 = vadd.f32 %v602, %v671
      %673 = vmatmul.f32.gmra.mxu0 %v617
      %v674 = vpop.f32.mrf.mxu0
      %v675 = vadd.f32 %v605, %v674
      %676 = vmatmul.f32.gmra.mxu0 %v620
      %v677 = vpop.f32.mrf.mxu0
      %v678 = vadd.f32 %v608, %v677
      %679 = vmatmul.f32.gmra.mxu0 %v623
      %v680 = vpop.f32.mrf.mxu0
      %v681 = vadd.f32 %v611, %v680
      %682 = vdwg.mxu0
      %s683 = sadd.s32 %s230, 3
      %s684 = smul.u32 %s683, 4
      %s685 = smul.addr %s684, 8
      %s686 = scalar_lea.vmem %s212, %s685
      %v687 = vld [vmem:[%s686] sm:$0xff]
      %v688 = vld [vmem:[%s686 + $0x8] sm:$0xff]
      %v689 = vld [vmem:[%s686 + $0x10] sm:$0xff]
      %v690 = vld [vmem:[%s686 + $0x18] sm:$0xff]
      %v691 = vld [vmem:[%s404] sm:$0xff]
      %v692 = vld [vmem:[%s404 + $0x8] sm:$0xff]
      %v693 = vld [vmem:[%s404 + $0x10] sm:$0xff]
      %v694 = vld [vmem:[%s404 + $0x18] sm:$0xff]
      %v696 = vsel %vm255, %v691, 0
      %v699 = vsel %vm255, %v692, 0
      %v702 = vsel %vm255, %v693, 0
      %v705 = vsel %vm255, %v694, 0
      %707 = vmatpush.msra.mxu0 0.0
      %708 = vmatpush.msra.mxu0 0.0
      %709 = vmatpush.msra.mxu0 0.0
      %710 = vmatpush.msra.mxu0 0.0
      %711 = vmatpush.msra.mxu0 0.0
      %712 = vmatpush.msra.mxu0 0.0
      %713 = vmatpush.msra.mxu0 0.0
      %714 = vmatpush.msra.mxu0 0.0
      %715 = vmatpush.msra.mxu0 0.0
      %716 = vmatpush.msra.mxu0 0.0
      %717 = vmatpush.msra.mxu0 0.0
      %718 = vmatpush.msra.mxu0 0.0
      %719 = vmatpush.msra.mxu0 0.0
      %720 = vmatpush.msra.mxu0 0.0
      %721 = vmatpush.msra.mxu0 %v689
      %722 = vmatpush.msra.mxu0 %v687
      %723 = vmatmul.f32.gmra.mxu0 %v696
      %v724 = vpop.f32.mrf.mxu0
      %v725 = vadd.f32 0.0, %v724
      %726 = vmatmul.f32.gmra.mxu0 %v699
      %v727 = vpop.f32.mrf.mxu0
      %v728 = vadd.f32 0.0, %v727
      %729 = vmatmul.f32.gmra.mxu0 %v702
      %v730 = vpop.f32.mrf.mxu0
      %v731 = vadd.f32 0.0, %v730
      %732 = vmatmul.f32.gmra.mxu0 %v705
      %v733 = vpop.f32.mrf.mxu0
      %v734 = vadd.f32 0.0, %v733
      %735 = vdwg.mxu0
      %736 = vmatpush.msra.mxu0 0.0
      %737 = vmatpush.msra.mxu0 0.0
      %738 = vmatpush.msra.mxu0 0.0
      %739 = vmatpush.msra.mxu0 0.0
      %740 = vmatpush.msra.mxu0 0.0
      %741 = vmatpush.msra.mxu0 0.0
      %742 = vmatpush.msra.mxu0 0.0
      %743 = vmatpush.msra.mxu0 0.0
      %744 = vmatpush.msra.mxu0 0.0
      %745 = vmatpush.msra.mxu0 0.0
      %746 = vmatpush.msra.mxu0 0.0
      %747 = vmatpush.msra.mxu0 0.0
      %748 = vmatpush.msra.mxu0 0.0
      %749 = vmatpush.msra.mxu0 0.0
      %750 = vmatpush.msra.mxu0 %v690
      %751 = vmatpush.msra.mxu0 %v688
      %752 = vmatmul.f32.gmra.mxu0 %v696
      %v753 = vpop.f32.mrf.mxu0
      %v754 = vadd.f32 0.0, %v753
      %755 = vmatmul.f32.gmra.mxu0 %v699
      %v756 = vpop.f32.mrf.mxu0
      %v757 = vadd.f32 0.0, %v756
      %758 = vmatmul.f32.gmra.mxu0 %v702
      %v759 = vpop.f32.mrf.mxu0
      %v760 = vadd.f32 0.0, %v759
      %761 = vmatmul.f32.gmra.mxu0 %v705
      %v762 = vpop.f32.mrf.mxu0
      %v763 = vadd.f32 0.0, %v762
      %764 = vdwg.mxu0
      %v765 = vadd.f32 %v643, %v725
      %v766 = vadd.f32 %v672, %v754
      %v767 = vadd.f32 %v646, %v728
      %v768 = vadd.f32 %v675, %v757
      %v769 = vadd.f32 %v649, %v731
      %v770 = vadd.f32 %v678, %v760
      %v771 = vadd.f32 %v652, %v734
      %v772 = vadd.f32 %v681, %v763
      %v773 = vld [vmem:[%s2] sm:$0xff]
      %v774 = vld [vmem:[%s2 + $0x8] sm:$0xff]
      %v775 = vld [vmem:[%s2 + $0x10] sm:$0xff]
      %v776 = vld [vmem:[%s2 + $0x18] sm:$0xff]
      %778 = vset.pattern.permute.xlu0 0
      %779 = vperm.xlu0 %778, %v773
      %v780 = vpop.permute.xlu0 %779
      %783 = vset.pattern.permute.xlu0 0
      %784 = vperm.xlu0 %783, %v774
      %v785 = vpop.permute.xlu0 %784
      %788 = vset.pattern.permute.xlu0 0
      %789 = vperm.xlu0 %788, %v775
      %v790 = vpop.permute.xlu0 %789
      %793 = vset.pattern.permute.xlu0 0
      %794 = vperm.xlu0 %793, %v776
      %v795 = vpop.permute.xlu0 %794
      %v797 = vadd.f32 %v765, %v780
      %v798 = vadd.f32 %v766, %v780
      %v799 = vadd.f32 %v767, %v785
      %v800 = vadd.f32 %v768, %v785
      %v801 = vadd.f32 %v769, %v790
      %v802 = vadd.f32 %v770, %v790
      %v803 = vadd.f32 %v771, %v795
      %v804 = vadd.f32 %v772, %v795
      %s805 = scalar_lea.vmem %s227, 64
      %806 = vst [vmem:[%s805] sm:$0xff] %v797
      %807 = vst [vmem:[%s805 + $0x8] sm:$0xff] %v798
      %808 = vst [vmem:[%s805 + $0x10] sm:$0xff] %v799
      %809 = vst [vmem:[%s805 + $0x18] sm:$0xff] %v800
      %810 = vst [vmem:[%s805 + $0x20] sm:$0xff] %v801
      %811 = vst [vmem:[%s805 + $0x28] sm:$0xff] %v802
      %812 = vst [vmem:[%s805 + $0x30] sm:$0xff] %v803
      %813 = vst [vmem:[%s805 + $0x38] sm:$0xff] %v804
      %v814 = vld [vmem:[%s399] sm:$0xff]
      %v815 = vld [vmem:[%s399 + $0x8] sm:$0xff]
      %v816 = vld [vmem:[%s399 + $0x10] sm:$0xff]
      %v817 = vld [vmem:[%s399 + $0x18] sm:$0xff]
      %v818 = vld [vmem:[%s1] sm:$0xff]
      %v819 = vld [vmem:[%s1 + $0x8] sm:$0xff]
      %v820 = vld [vmem:[%s1 + $0x10] sm:$0xff]
      %v821 = vld [vmem:[%s1 + $0x18] sm:$0xff]
      %v822 = vld [vmem:[%s686] sm:$0xff]
      %v823 = vld [vmem:[%s686 + $0x8] sm:$0xff]
      %v824 = vld [vmem:[%s686 + $0x10] sm:$0xff]
      %v825 = vld [vmem:[%s686 + $0x18] sm:$0xff]
      %v826 = vld [vmem:[%s250] sm:$0xff]
      %v827 = vld [vmem:[%s250 + $0x8] sm:$0xff]
      %v828 = vld [vmem:[%s250 + $0x10] sm:$0xff]
      %v829 = vld [vmem:[%s250 + $0x18] sm:$0xff]
      %v831 = vsel %vm255, %v826, 0
      %v834 = vsel %vm255, %v827, 0
      %v837 = vsel %vm255, %v828, 0
      %v840 = vsel %vm255, %v829, 0
      %842 = vmatpush.msra.mxu0 0.0
      %843 = vmatpush.msra.mxu0 0.0
      %844 = vmatpush.msra.mxu0 0.0
      %845 = vmatpush.msra.mxu0 0.0
      %846 = vmatpush.msra.mxu0 0.0
      %847 = vmatpush.msra.mxu0 0.0
      %848 = vmatpush.msra.mxu0 0.0
      %849 = vmatpush.msra.mxu0 0.0
      %850 = vmatpush.msra.mxu0 0.0
      %851 = vmatpush.msra.mxu0 0.0
      %852 = vmatpush.msra.mxu0 0.0
      %853 = vmatpush.msra.mxu0 0.0
      %854 = vmatpush.msra.mxu0 0.0
      %855 = vmatpush.msra.mxu0 0.0
      %856 = vmatpush.msra.mxu0 %v824
      %857 = vmatpush.msra.mxu0 %v822
      %858 = vmatmul.f32.gmra.mxu0 %v831
      %v859 = vpop.f32.mrf.mxu0
      %v860 = vadd.f32 0.0, %v859
      %861 = vmatmul.f32.gmra.mxu0 %v834
      %v862 = vpop.f32.mrf.mxu0
      %v863 = vadd.f32 0.0, %v862
      %864 = vmatmul.f32.gmra.mxu0 %v837
      %v865 = vpop.f32.mrf.mxu0
      %v866 = vadd.f32 0.0, %v865
      %867 = vmatmul.f32.gmra.mxu0 %v840
      %v868 = vpop.f32.mrf.mxu0
      %v869 = vadd.f32 0.0, %v868
      %870 = vdwg.mxu0
      %871 = vmatpush.msra.mxu0 0.0
      %872 = vmatpush.msra.mxu0 0.0
      %873 = vmatpush.msra.mxu0 0.0
      %874 = vmatpush.msra.mxu0 0.0
      %875 = vmatpush.msra.mxu0 0.0
      %876 = vmatpush.msra.mxu0 0.0
      %877 = vmatpush.msra.mxu0 0.0
      %878 = vmatpush.msra.mxu0 0.0
      %879 = vmatpush.msra.mxu0 0.0
      %880 = vmatpush.msra.mxu0 0.0
      %881 = vmatpush.msra.mxu0 0.0
      %882 = vmatpush.msra.mxu0 0.0
      %883 = vmatpush.msra.mxu0 0.0
      %884 = vmatpush.msra.mxu0 0.0
      %885 = vmatpush.msra.mxu0 %v825
      %886 = vmatpush.msra.mxu0 %v823
      %887 = vmatmul.f32.gmra.mxu0 %v831
      %v888 = vpop.f32.mrf.mxu0
      %v889 = vadd.f32 0.0, %v888
      %890 = vmatmul.f32.gmra.mxu0 %v834
      %v891 = vpop.f32.mrf.mxu0
      %v892 = vadd.f32 0.0, %v891
      %893 = vmatmul.f32.gmra.mxu0 %v837
      %v894 = vpop.f32.mrf.mxu0
      %v895 = vadd.f32 0.0, %v894
      %896 = vmatmul.f32.gmra.mxu0 %v840
      %v897 = vpop.f32.mrf.mxu0
      %v898 = vadd.f32 0.0, %v897
      %899 = vdwg.mxu0
      %v901 = vsel %vm255, %v818, 0
      %v904 = vsel %vm255, %v819, 0
      %v907 = vsel %vm255, %v820, 0
      %v910 = vsel %vm255, %v821, 0
      %912 = vmatpush.msra.mxu0 0.0
      %913 = vmatpush.msra.mxu0 0.0
      %914 = vmatpush.msra.mxu0 0.0
      %915 = vmatpush.msra.mxu0 0.0
      %916 = vmatpush.msra.mxu0 0.0
      %917 = vmatpush.msra.mxu0 0.0
      %918 = vmatpush.msra.mxu0 0.0
      %919 = vmatpush.msra.mxu0 0.0
      %920 = vmatpush.msra.mxu0 0.0
      %921 = vmatpush.msra.mxu0 0.0
      %922 = vmatpush.msra.mxu0 0.0
      %923 = vmatpush.msra.mxu0 0.0
      %924 = vmatpush.msra.mxu0 0.0
      %925 = vmatpush.msra.mxu0 0.0
      %926 = vmatpush.msra.mxu0 %v816
      %927 = vmatpush.msra.mxu0 %v814
      %928 = vmatmul.f32.gmra.mxu0 %v901
      %v929 = vpop.f32.mrf.mxu0
      %v930 = vadd.f32 %v860, %v929
      %931 = vmatmul.f32.gmra.mxu0 %v904
      %v932 = vpop.f32.mrf.mxu0
      %v933 = vadd.f32 %v863, %v932
      %934 = vmatmul.f32.gmra.mxu0 %v907
      %v935 = vpop.f32.mrf.mxu0
      %v936 = vadd.f32 %v866, %v935
      %937 = vmatmul.f32.gmra.mxu0 %v910
      %v938 = vpop.f32.mrf.mxu0
      %v939 = vadd.f32 %v869, %v938
      %940 = vdwg.mxu0
      %941 = vmatpush.msra.mxu0 0.0
      %942 = vmatpush.msra.mxu0 0.0
      %943 = vmatpush.msra.mxu0 0.0
      %944 = vmatpush.msra.mxu0 0.0
      %945 = vmatpush.msra.mxu0 0.0
      %946 = vmatpush.msra.mxu0 0.0
      %947 = vmatpush.msra.mxu0 0.0
      %948 = vmatpush.msra.mxu0 0.0
      %949 = vmatpush.msra.mxu0 0.0
      %950 = vmatpush.msra.mxu0 0.0
      %951 = vmatpush.msra.mxu0 0.0
      %952 = vmatpush.msra.mxu0 0.0
      %953 = vmatpush.msra.mxu0 0.0
      %954 = vmatpush.msra.mxu0 0.0
      %955 = vmatpush.msra.mxu0 %v817
      %956 = vmatpush.msra.mxu0 %v815
      %957 = vmatmul.f32.gmra.mxu0 %v901
      %v958 = vpop.f32.mrf.mxu0
      %v959 = vadd.f32 %v889, %v958
      %960 = vmatmul.f32.gmra.mxu0 %v904
      %v961 = vpop.f32.mrf.mxu0
      %v962 = vadd.f32 %v892, %v961
      %963 = vmatmul.f32.gmra.mxu0 %v907
      %v964 = vpop.f32.mrf.mxu0
      %v965 = vadd.f32 %v895, %v964
      %966 = vmatmul.f32.gmra.mxu0 %v910
      %v967 = vpop.f32.mrf.mxu0
      %v968 = vadd.f32 %v898, %v967
      %969 = vdwg.mxu0
      %s970 = sadd.s32 %s230, 4
      %s971 = smul.u32 %s970, 4
      %s972 = smul.addr %s971, 8
      %s973 = scalar_lea.vmem %s212, %s972
      %v974 = vld [vmem:[%s973] sm:$0xff]
      %v975 = vld [vmem:[%s973 + $0x8] sm:$0xff]
      %v976 = vld [vmem:[%s973 + $0x10] sm:$0xff]
      %v977 = vld [vmem:[%s973 + $0x18] sm:$0xff]
      %v978 = vld [vmem:[%s404] sm:$0xff]
      %v979 = vld [vmem:[%s404 + $0x8] sm:$0xff]
      %v980 = vld [vmem:[%s404 + $0x10] sm:$0xff]
      %v981 = vld [vmem:[%s404 + $0x18] sm:$0xff]
      %v983 = vsel %vm255, %v978, 0
      %v986 = vsel %vm255, %v979, 0
      %v989 = vsel %vm255, %v980, 0
      %v992 = vsel %vm255, %v981, 0
      %994 = vmatpush.msra.mxu0 0.0
      %995 = vmatpush.msra.mxu0 0.0
      %996 = vmatpush.msra.mxu0 0.0
      %997 = vmatpush.msra.mxu0 0.0
      %998 = vmatpush.msra.mxu0 0.0
      %999 = vmatpush.msra.mxu0 0.0
      %1000 = vmatpush.msra.mxu0 0.0
      %1001 = vmatpush.msra.mxu0 0.0
      %1002 = vmatpush.msra.mxu0 0.0
      %1003 = vmatpush.msra.mxu0 0.0
      %1004 = vmatpush.msra.mxu0 0.0
      %1005 = vmatpush.msra.mxu0 0.0
      %1006 = vmatpush.msra.mxu0 0.0
      %1007 = vmatpush.msra.mxu0 0.0
      %1008 = vmatpush.msra.mxu0 %v976
      %1009 = vmatpush.msra.mxu0 %v974
      %1010 = vmatmul.f32.gmra.mxu0 %v983
      %v1011 = vpop.f32.mrf.mxu0
      %v1012 = vadd.f32 0.0, %v1011
      %1013 = vmatmul.f32.gmra.mxu0 %v986
      %v1014 = vpop.f32.mrf.mxu0
      %v1015 = vadd.f32 0.0, %v1014
      %1016 = vmatmul.f32.gmra.mxu0 %v989
      %v1017 = vpop.f32.mrf.mxu0
      %v1018 = vadd.f32 0.0, %v1017
      %1019 = vmatmul.f32.gmra.mxu0 %v992
      %v1020 = vpop.f32.mrf.mxu0
      %v1021 = vadd.f32 0.0, %v1020
      %1022 = vdwg.mxu0
      %1023 = vmatpush.msra.mxu0 0.0
      %1024 = vmatpush.msra.mxu0 0.0
      %1025 = vmatpush.msra.mxu0 0.0
      %1026 = vmatpush.msra.mxu0 0.0
      %1027 = vmatpush.msra.mxu0 0.0
      %1028 = vmatpush.msra.mxu0 0.0
      %1029 = vmatpush.msra.mxu0 0.0
      %1030 = vmatpush.msra.mxu0 0.0
      %1031 = vmatpush.msra.mxu0 0.0
      %1032 = vmatpush.msra.mxu0 0.0
      %1033 = vmatpush.msra.mxu0 0.0
      %1034 = vmatpush.msra.mxu0 0.0
      %1035 = vmatpush.msra.mxu0 0.0
      %1036 = vmatpush.msra.mxu0 0.0
      %1037 = vmatpush.msra.mxu0 %v977
      %1038 = vmatpush.msra.mxu0 %v975
      %1039 = vmatmul.f32.gmra.mxu0 %v983
      %v1040 = vpop.f32.mrf.mxu0
      %v1041 = vadd.f32 0.0, %v1040
      %1042 = vmatmul.f32.gmra.mxu0 %v986
      %v1043 = vpop.f32.mrf.mxu0
      %v1044 = vadd.f32 0.0, %v1043
      %1045 = vmatmul.f32.gmra.mxu0 %v989
      %v1046 = vpop.f32.mrf.mxu0
      %v1047 = vadd.f32 0.0, %v1046
      %1048 = vmatmul.f32.gmra.mxu0 %v992
      %v1049 = vpop.f32.mrf.mxu0
      %v1050 = vadd.f32 0.0, %v1049
      %1051 = vdwg.mxu0
      %v1052 = vadd.f32 %v930, %v1012
      %v1053 = vadd.f32 %v959, %v1041
      %v1054 = vadd.f32 %v933, %v1015
      %v1055 = vadd.f32 %v962, %v1044
      %v1056 = vadd.f32 %v936, %v1018
      %v1057 = vadd.f32 %v965, %v1047
      %v1058 = vadd.f32 %v939, %v1021
      %v1059 = vadd.f32 %v968, %v1050
      %v1060 = vld [vmem:[%s2] sm:$0xff]
      %v1061 = vld [vmem:[%s2 + $0x8] sm:$0xff]
      %v1062 = vld [vmem:[%s2 + $0x10] sm:$0xff]
      %v1063 = vld [vmem:[%s2 + $0x18] sm:$0xff]
      %1065 = vset.pattern.permute.xlu0 0
      %1066 = vperm.xlu0 %1065, %v1060
      %v1067 = vpop.permute.xlu0 %1066
      %1070 = vset.pattern.permute.xlu0 0
      %1071 = vperm.xlu0 %1070, %v1061
      %v1072 = vpop.permute.xlu0 %1071
      %1075 = vset.pattern.permute.xlu0 0
      %1076 = vperm.xlu0 %1075, %v1062
      %v1077 = vpop.permute.xlu0 %1076
      %1080 = vset.pattern.permute.xlu0 0
      %1081 = vperm.xlu0 %1080, %v1063
      %v1082 = vpop.permute.xlu0 %1081
      %v1084 = vadd.f32 %v1052, %v1067
      %v1085 = vadd.f32 %v1053, %v1067
      %v1086 = vadd.f32 %v1054, %v1072
      %v1087 = vadd.f32 %v1055, %v1072
      %v1088 = vadd.f32 %v1056, %v1077
      %v1089 = vadd.f32 %v1057, %v1077
      %v1090 = vadd.f32 %v1058, %v1082
      %v1091 = vadd.f32 %v1059, %v1082
      %s1092 = scalar_lea.vmem %s227, 128
      %1093 = vst [vmem:[%s1092] sm:$0xff] %v1084
      %1094 = vst [vmem:[%s1092 + $0x8] sm:$0xff] %v1085
      %1095 = vst [vmem:[%s1092 + $0x10] sm:$0xff] %v1086
      %1096 = vst [vmem:[%s1092 + $0x18] sm:$0xff] %v1087
      %1097 = vst [vmem:[%s1092 + $0x20] sm:$0xff] %v1088
      %1098 = vst [vmem:[%s1092 + $0x28] sm:$0xff] %v1089
      %1099 = vst [vmem:[%s1092 + $0x30] sm:$0xff] %v1090
      %1100 = vst [vmem:[%s1092 + $0x38] sm:$0xff] %v1091
      %v1101 = vld [vmem:[%s686] sm:$0xff]
      %v1102 = vld [vmem:[%s686 + $0x8] sm:$0xff]
      %v1103 = vld [vmem:[%s686 + $0x10] sm:$0xff]
      %v1104 = vld [vmem:[%s686 + $0x18] sm:$0xff]
      %v1105 = vld [vmem:[%s1] sm:$0xff]
      %v1106 = vld [vmem:[%s1 + $0x8] sm:$0xff]
      %v1107 = vld [vmem:[%s1 + $0x10] sm:$0xff]
      %v1108 = vld [vmem:[%s1 + $0x18] sm:$0xff]
      %v1109 = vld [vmem:[%s973] sm:$0xff]
      %v1110 = vld [vmem:[%s973 + $0x8] sm:$0xff]
      %v1111 = vld [vmem:[%s973 + $0x10] sm:$0xff]
      %v1112 = vld [vmem:[%s973 + $0x18] sm:$0xff]
      %v1113 = vld [vmem:[%s250] sm:$0xff]
      %v1114 = vld [vmem:[%s250 + $0x8] sm:$0xff]
      %v1115 = vld [vmem:[%s250 + $0x10] sm:$0xff]
      %v1116 = vld [vmem:[%s250 + $0x18] sm:$0xff]
      %v1118 = vsel %vm255, %v1113, 0
      %v1121 = vsel %vm255, %v1114, 0
      %v1124 = vsel %vm255, %v1115, 0
      %v1127 = vsel %vm255, %v1116, 0
      %1129 = vmatpush.msra.mxu0 0.0
      %1130 = vmatpush.msra.mxu0 0.0
      %1131 = vmatpush.msra.mxu0 0.0
      %1132 = vmatpush.msra.mxu0 0.0
      %1133 = vmatpush.msra.mxu0 0.0
      %1134 = vmatpush.msra.mxu0 0.0
      %1135 = vmatpush.msra.mxu0 0.0
      %1136 = vmatpush.msra.mxu0 0.0
      %1137 = vmatpush.msra.mxu0 0.0
      %1138 = vmatpush.msra.mxu0 0.0
      %1139 = vmatpush.msra.mxu0 0.0
      %1140 = vmatpush.msra.mxu0 0.0
      %1141 = vmatpush.msra.mxu0 0.0
      %1142 = vmatpush.msra.mxu0 0.0
      %1143 = vmatpush.msra.mxu0 %v1111
      %1144 = vmatpush.msra.mxu0 %v1109
      %1145 = vmatmul.f32.gmra.mxu0 %v1118
      %v1146 = vpop.f32.mrf.mxu0
      %v1147 = vadd.f32 0.0, %v1146
      %1148 = vmatmul.f32.gmra.mxu0 %v1121
      %v1149 = vpop.f32.mrf.mxu0
      %v1150 = vadd.f32 0.0, %v1149
      %1151 = vmatmul.f32.gmra.mxu0 %v1124
      %v1152 = vpop.f32.mrf.mxu0
      %v1153 = vadd.f32 0.0, %v1152
      %1154 = vmatmul.f32.gmra.mxu0 %v1127
      %v1155 = vpop.f32.mrf.mxu0
      %v1156 = vadd.f32 0.0, %v1155
      %1157 = vdwg.mxu0
      %1158 = vmatpush.msra.mxu0 0.0
      %1159 = vmatpush.msra.mxu0 0.0
      %1160 = vmatpush.msra.mxu0 0.0
      %1161 = vmatpush.msra.mxu0 0.0
      %1162 = vmatpush.msra.mxu0 0.0
      %1163 = vmatpush.msra.mxu0 0.0
      %1164 = vmatpush.msra.mxu0 0.0
      %1165 = vmatpush.msra.mxu0 0.0
      %1166 = vmatpush.msra.mxu0 0.0
      %1167 = vmatpush.msra.mxu0 0.0
      %1168 = vmatpush.msra.mxu0 0.0
      %1169 = vmatpush.msra.mxu0 0.0
      %1170 = vmatpush.msra.mxu0 0.0
      %1171 = vmatpush.msra.mxu0 0.0
      %1172 = vmatpush.msra.mxu0 %v1112
      %1173 = vmatpush.msra.mxu0 %v1110
      %1174 = vmatmul.f32.gmra.mxu0 %v1118
      %v1175 = vpop.f32.mrf.mxu0
      %v1176 = vadd.f32 0.0, %v1175
      %1177 = vmatmul.f32.gmra.mxu0 %v1121
      %v1178 = vpop.f32.mrf.mxu0
      %v1179 = vadd.f32 0.0, %v1178
      %1180 = vmatmul.f32.gmra.mxu0 %v1124
      %v1181 = vpop.f32.mrf.mxu0
      %v1182 = vadd.f32 0.0, %v1181
      %1183 = vmatmul.f32.gmra.mxu0 %v1127
      %v1184 = vpop.f32.mrf.mxu0
      %v1185 = vadd.f32 0.0, %v1184
      %1186 = vdwg.mxu0
      %v1188 = vsel %vm255, %v1105, 0
      %v1191 = vsel %vm255, %v1106, 0
      %v1194 = vsel %vm255, %v1107, 0
      %v1197 = vsel %vm255, %v1108, 0
      %1199 = vmatpush.msra.mxu0 0.0
      %1200 = vmatpush.msra.mxu0 0.0
      %1201 = vmatpush.msra.mxu0 0.0
      %1202 = vmatpush.msra.mxu0 0.0
      %1203 = vmatpush.msra.mxu0 0.0
      %1204 = vmatpush.msra.mxu0 0.0
      %1205 = vmatpush.msra.mxu0 0.0
      %1206 = vmatpush.msra.mxu0 0.0
      %1207 = vmatpush.msra.mxu0 0.0
      %1208 = vmatpush.msra.mxu0 0.0
      %1209 = vmatpush.msra.mxu0 0.0
      %1210 = vmatpush.msra.mxu0 0.0
      %1211 = vmatpush.msra.mxu0 0.0
      %1212 = vmatpush.msra.mxu0 0.0
      %1213 = vmatpush.msra.mxu0 %v1103
      %1214 = vmatpush.msra.mxu0 %v1101
      %1215 = vmatmul.f32.gmra.mxu0 %v1188
      %v1216 = vpop.f32.mrf.mxu0
      %v1217 = vadd.f32 %v1147, %v1216
      %1218 = vmatmul.f32.gmra.mxu0 %v1191
      %v1219 = vpop.f32.mrf.mxu0
      %v1220 = vadd.f32 %v1150, %v1219
      %1221 = vmatmul.f32.gmra.mxu0 %v1194
      %v1222 = vpop.f32.mrf.mxu0
      %v1223 = vadd.f32 %v1153, %v1222
      %1224 = vmatmul.f32.gmra.mxu0 %v1197
      %v1225 = vpop.f32.mrf.mxu0
      %v1226 = vadd.f32 %v1156, %v1225
      %1227 = vdwg.mxu0
      %1228 = vmatpush.msra.mxu0 0.0
      %1229 = vmatpush.msra.mxu0 0.0
      %1230 = vmatpush.msra.mxu0 0.0
      %1231 = vmatpush.msra.mxu0 0.0
      %1232 = vmatpush.msra.mxu0 0.0
      %1233 = vmatpush.msra.mxu0 0.0
      %1234 = vmatpush.msra.mxu0 0.0
      %1235 = vmatpush.msra.mxu0 0.0
      %1236 = vmatpush.msra.mxu0 0.0
      %1237 = vmatpush.msra.mxu0 0.0
      %1238 = vmatpush.msra.mxu0 0.0
      %1239 = vmatpush.msra.mxu0 0.0
      %1240 = vmatpush.msra.mxu0 0.0
      %1241 = vmatpush.msra.mxu0 0.0
      %1242 = vmatpush.msra.mxu0 %v1104
      %1243 = vmatpush.msra.mxu0 %v1102
      %1244 = vmatmul.f32.gmra.mxu0 %v1188
      %v1245 = vpop.f32.mrf.mxu0
      %v1246 = vadd.f32 %v1176, %v1245
      %1247 = vmatmul.f32.gmra.mxu0 %v1191
      %v1248 = vpop.f32.mrf.mxu0
      %v1249 = vadd.f32 %v1179, %v1248
      %1250 = vmatmul.f32.gmra.mxu0 %v1194
      %v1251 = vpop.f32.mrf.mxu0
      %v1252 = vadd.f32 %v1182, %v1251
      %1253 = vmatmul.f32.gmra.mxu0 %v1197
      %v1254 = vpop.f32.mrf.mxu0
      %v1255 = vadd.f32 %v1185, %v1254
      %1256 = vdwg.mxu0
      %s1257 = sadd.s32 %s230, 5
      %s1258 = smul.u32 %s1257, 4
      %s1259 = smul.addr %s1258, 8
      %s1260 = scalar_lea.vmem %s212, %s1259
      %v1261 = vld [vmem:[%s1260] sm:$0xff]
      %v1262 = vld [vmem:[%s1260 + $0x8] sm:$0xff]
      %v1263 = vld [vmem:[%s1260 + $0x10] sm:$0xff]
      %v1264 = vld [vmem:[%s1260 + $0x18] sm:$0xff]
      %v1265 = vld [vmem:[%s404] sm:$0xff]
      %v1266 = vld [vmem:[%s404 + $0x8] sm:$0xff]
      %v1267 = vld [vmem:[%s404 + $0x10] sm:$0xff]
      %v1268 = vld [vmem:[%s404 + $0x18] sm:$0xff]
      %v1270 = vsel %vm255, %v1265, 0
      %v1273 = vsel %vm255, %v1266, 0
      %v1276 = vsel %vm255, %v1267, 0
      %v1279 = vsel %vm255, %v1268, 0
      %1281 = vmatpush.msra.mxu0 0.0
      %1282 = vmatpush.msra.mxu0 0.0
      %1283 = vmatpush.msra.mxu0 0.0
      %1284 = vmatpush.msra.mxu0 0.0
      %1285 = vmatpush.msra.mxu0 0.0
      %1286 = vmatpush.msra.mxu0 0.0
      %1287 = vmatpush.msra.mxu0 0.0
      %1288 = vmatpush.msra.mxu0 0.0
      %1289 = vmatpush.msra.mxu0 0.0
      %1290 = vmatpush.msra.mxu0 0.0
      %1291 = vmatpush.msra.mxu0 0.0
      %1292 = vmatpush.msra.mxu0 0.0
      %1293 = vmatpush.msra.mxu0 0.0
      %1294 = vmatpush.msra.mxu0 0.0
      %1295 = vmatpush.msra.mxu0 %v1263
      %1296 = vmatpush.msra.mxu0 %v1261
      %1297 = vmatmul.f32.gmra.mxu0 %v1270
      %v1298 = vpop.f32.mrf.mxu0
      %v1299 = vadd.f32 0.0, %v1298
      %1300 = vmatmul.f32.gmra.mxu0 %v1273
      %v1301 = vpop.f32.mrf.mxu0
      %v1302 = vadd.f32 0.0, %v1301
      %1303 = vmatmul.f32.gmra.mxu0 %v1276
      %v1304 = vpop.f32.mrf.mxu0
      %v1305 = vadd.f32 0.0, %v1304
      %1306 = vmatmul.f32.gmra.mxu0 %v1279
      %v1307 = vpop.f32.mrf.mxu0
      %v1308 = vadd.f32 0.0, %v1307
      %1309 = vdwg.mxu0
      %1310 = vmatpush.msra.mxu0 0.0
      %1311 = vmatpush.msra.mxu0 0.0
      %1312 = vmatpush.msra.mxu0 0.0
      %1313 = vmatpush.msra.mxu0 0.0
      %1314 = vmatpush.msra.mxu0 0.0
      %1315 = vmatpush.msra.mxu0 0.0
      %1316 = vmatpush.msra.mxu0 0.0
      %1317 = vmatpush.msra.mxu0 0.0
      %1318 = vmatpush.msra.mxu0 0.0
      %1319 = vmatpush.msra.mxu0 0.0
      %1320 = vmatpush.msra.mxu0 0.0
      %1321 = vmatpush.msra.mxu0 0.0
      %1322 = vmatpush.msra.mxu0 0.0
      %1323 = vmatpush.msra.mxu0 0.0
      %1324 = vmatpush.msra.mxu0 %v1264
      %1325 = vmatpush.msra.mxu0 %v1262
      %1326 = vmatmul.f32.gmra.mxu0 %v1270
      %v1327 = vpop.f32.mrf.mxu0
      %v1328 = vadd.f32 0.0, %v1327
      %1329 = vmatmul.f32.gmra.mxu0 %v1273
      %v1330 = vpop.f32.mrf.mxu0
      %v1331 = vadd.f32 0.0, %v1330
      %1332 = vmatmul.f32.gmra.mxu0 %v1276
      %v1333 = vpop.f32.mrf.mxu0
      %v1334 = vadd.f32 0.0, %v1333
      %1335 = vmatmul.f32.gmra.mxu0 %v1279
      %v1336 = vpop.f32.mrf.mxu0
      %v1337 = vadd.f32 0.0, %v1336
      %1338 = vdwg.mxu0
      %v1339 = vadd.f32 %v1217, %v1299
      %v1340 = vadd.f32 %v1246, %v1328
      %v1341 = vadd.f32 %v1220, %v1302
      %v1342 = vadd.f32 %v1249, %v1331
      %v1343 = vadd.f32 %v1223, %v1305
      %v1344 = vadd.f32 %v1252, %v1334
      %v1345 = vadd.f32 %v1226, %v1308
      %v1346 = vadd.f32 %v1255, %v1337
      %v1347 = vld [vmem:[%s2] sm:$0xff]
      %v1348 = vld [vmem:[%s2 + $0x8] sm:$0xff]
      %v1349 = vld [vmem:[%s2 + $0x10] sm:$0xff]
      %v1350 = vld [vmem:[%s2 + $0x18] sm:$0xff]
      %1352 = vset.pattern.permute.xlu0 0
      %1353 = vperm.xlu0 %1352, %v1347
      %v1354 = vpop.permute.xlu0 %1353
      %1357 = vset.pattern.permute.xlu0 0
      %1358 = vperm.xlu0 %1357, %v1348
      %v1359 = vpop.permute.xlu0 %1358
      %1362 = vset.pattern.permute.xlu0 0
      %1363 = vperm.xlu0 %1362, %v1349
      %v1364 = vpop.permute.xlu0 %1363
      %1367 = vset.pattern.permute.xlu0 0
      %1368 = vperm.xlu0 %1367, %v1350
      %v1369 = vpop.permute.xlu0 %1368
      %v1371 = vadd.f32 %v1339, %v1354
      %v1372 = vadd.f32 %v1340, %v1354
      %v1373 = vadd.f32 %v1341, %v1359
      %v1374 = vadd.f32 %v1342, %v1359
      %v1375 = vadd.f32 %v1343, %v1364
      %v1376 = vadd.f32 %v1344, %v1364
      %v1377 = vadd.f32 %v1345, %v1369
      %v1378 = vadd.f32 %v1346, %v1369
      %s1379 = scalar_lea.vmem %s227, 192
      %1380 = vst [vmem:[%s1379] sm:$0xff] %v1371
      %1381 = vst [vmem:[%s1379 + $0x8] sm:$0xff] %v1372
      %1382 = vst [vmem:[%s1379 + $0x10] sm:$0xff] %v1373
      %1383 = vst [vmem:[%s1379 + $0x18] sm:$0xff] %v1374
      %1384 = vst [vmem:[%s1379 + $0x20] sm:$0xff] %v1375
      %1385 = vst [vmem:[%s1379 + $0x28] sm:$0xff] %v1376
      %1386 = vst [vmem:[%s1379 + $0x30] sm:$0xff] %v1377
      %1387 = vst [vmem:[%s1379 + $0x38] sm:$0xff] %v1378
      %s1388 = smul.u32 4, %s21
      %s1389 = smul.u32 2, %s20
      %p1390 = scmp.lt.s32.totalorder %s19, 1
      %s1391 = scalar_select %p1390, %s19, 1
      %p1392 = scmp.lt.s32.totalorder %s1388, 3
      %s1393 = scalar_select %p1392, %s1388, 3
      %p1394 = scmp.lt.s32.totalorder %s1389, 1
      %s1395 = scalar_select %p1394, %s1389, 1
      %s1396 = smul.addr %s1393, 8
      %s1397 = sadd.s32 %s1395, %s1396
      %s1398 = smul.addr %s1391, 32
      %s1399 = sadd.s32 %s1397, %s1398
      %s1400 = smul.addr %s1399, 8
      %s1401 = scalar_lea.vmem %s3, %s1400
      // Predicated region
      $region33: #{up_split_forward.1} parent=31 // pred_check
        %p1402 = pneg %p125
      $region34: #{up_split_forward.1} parent=31 // pred_check_branch
        %1404 = sbr.rel (%p1402) target = $region36
      $region35: #{up_split_forward.1} parent=31 // pred_region
        %s1405 = smul.u32 4, %s21
        %s1406 = smul.u32 2, %s20
      $region36: #{up_split_forward.1} parent=31 // pred_fallthru
        _
    $region32: #{up_split_forward.1} parent=5 // pred_fallthru
      _
    %p1407 = scmp.le.s32.totalorder 2, %s9
    // Predicated region
    $region37: #{up_split_forward.1} parent=5 // pred_check
      %p1408 = pneg %p1407
    $region38: #{up_split_forward.1} parent=5 // pred_check_branch
      %1410 = sbr.rel (%p1408) target = $region40
    $region39: #{up_split_forward.1} parent=5 // pred_region
      %s1411 = ssub.s32 %s9, 2
      // Predicated region
      $region41: #{up_split_forward.1} parent=39 // pred_check
        %p1412 = pneg %p131
      $region42: #{up_split_forward.1} parent=39 // pred_check_branch
        %1414 = sbr.rel (%p1412) target = $region44
      $region43: #{up_split_forward.1} parent=39 // pred_region
        %s1415 = smul.u32 4, %s24
        %s1416 = smul.u32 2, %s23
        %p1417 = scmp.lt.s32.totalorder %s22, 1
        %s1418 = scalar_select %p1417, %s22, 1
        %p1419 = scmp.lt.s32.totalorder %s1415, 3
        %s1420 = scalar_select %p1419, %s1415, 3
        %p1421 = scmp.lt.s32.totalorder %s1416, 1
        %s1422 = scalar_select %p1421, %s1416, 1
        %s1423 = smul.addr %s1420, 8
        %s1424 = sadd.s32 %s1422, %s1423
        %s1425 = smul.addr %s1418, 32
        %s1426 = sadd.s32 %s1424, %s1425
        %s1427 = smul.addr %s1426, 8
        %s1428 = scalar_lea.vmem %s3, %s1427
      $region44: #{up_split_forward.1} parent=39 // pred_fallthru
        _
    $region40: #{up_split_forward.1} parent=5 // pred_fallthru
      _
  $region6: #{up_split_forward.1} parent=0 // loop_footer
    %s13 = sadd.s32 1, %s9
  $region7: #{up_split_forward.1} parent=0 // loop_footer_branch
    %8 = sbr.rel target = $region3
  $region8: #{up_split_forward.1} parent=0 // loop_exit
    _

</llo_original>
